<compile_context>
chip_gen: v7x
topology: tpu7x:2x2x1
jax: 0.10.0
libtpu: 0.0.40
codegen_flags: <defaults>
</compile_context>

<pallas_src>
import functools

import jax
import jax.numpy as jnp
from jax.experimental import pallas as pl
from jax.experimental.pallas import tpu as pltpu

# Module constants: weights[0] = (512, 2), weights[1] = (512, 256, 3);
# x.reshape(1, 1792, 7, 1) implies x has 256 * 7 * 7 elements.
C_IN, C_OUT, H, W, K = 256, 512, 7, 7, 3
HW = H * W            # 49 flattened (h, w) positions
LANES = 128           # lane-padded spatial axis (one full vreg of lanes)
C_TILE = 256          # output-channel tile -> grid=(2,)

# TODO(synk): torch picks shift_direction = +/-1 at random in __init__ (host RNG);
# fixed deterministically here. Both directions are validated in __main__.
SHIFT_DIRECTION = 1


def _fused_kernel(x_ref, w2_ref, w1_ref, o_ref, *, d1, d2):
    # x_ref : (256, 128) f32  -- lanes [0,49) hold x flattened as n = h*7 + w
    # w2_ref: (3, 256, 256) bf16 tile -- [k, out_ch_tile, in_ch]
    # w1_ref: (256, 2) f32 tile
    # o_ref : (256, 128) f32 tile (lanes >= 49 are don't-care, sliced off outside)
    x = x_ref[...]
    lane_x = jax.lax.broadcasted_iota(jnp.int32, x.shape, 1)       # n = h*7 + w
    in_img = lane_x < HW
    zero = jnp.zeros_like(x)

    # Conv taps over w (kernel 3, zero pad 1): x[..., w-1], x[..., w], x[..., w+1]
    x_m1 = jnp.where((lane_x % W != 0) & in_img, pltpu.roll(x, 1, 1), zero)
    x_p1 = jnp.where((lane_x % W != W - 1) & in_img, pltpu.roll(x, LANES - 1, 1), zero)

    # Three accumulating (256,256)@(256,128) bf16 matmuls, f32 accumulation.
    bf16 = jnp.bfloat16
    t = jnp.dot(w2_ref[0], x_m1.astype(bf16), preferred_element_type=jnp.float32)
    t = t + jnp.dot(w2_ref[1], x.astype(bf16), preferred_element_type=jnp.float32)
    t = t + jnp.dot(w2_ref[2], x_p1.astype(bf16), preferred_element_type=jnp.float32)

    lane_o = jax.lax.broadcasted_iota(jnp.int32, o_ref.shape, 1)

    def roll_mod_hw(v, d):
        # out[:, n] = v[:, (n - d) % 49] for n < 49; d is a static int in [0, 49).
        # Both branches only read source lanes < 49, so pad-lane garbage never leaks.
        a = pltpu.roll(v, d % LANES, 1)
        b = pltpu.roll(v, (d - HW) % LANES, 1)
        return jnp.where(lane_o >= d, a, b)

    # w1 scale-add epilogue (per-output-channel scalars, lane broadcast).
    o_ref[...] = (w1_ref[:, 0:1] * roll_mod_hw(t, d1)
                  + w1_ref[:, 1:2] * roll_mod_hw(t, d2))


def _prepare_weights(w1, w2):
    # Weight-only prep, computed once outside the per-call path.
    # w2 (512, 256, 3) -> (3, 512, 256) bf16, indexed [k, out_ch, in_ch].
    return w1.astype(jnp.float32), jnp.transpose(w2, (2, 0, 1)).astype(jnp.bfloat16)


@functools.partial(jax.jit, static_argnames=("shift",))
def _forward_impl(x, w1f, w2t, shift):
    # Only a tiny lane-pad of x happens in XLA; im2col / rolls live in the kernel.
    xpad = jnp.pad(x.reshape(C_IN, HW).astype(jnp.float32),
                   ((0, 0), (0, LANES - HW)))                     # (256, 128)

    # h-roll of the conv result by s on the flattened n = h*7+w axis is a roll
    # by d = 7*s (mod 49).  (s1, s2) pair with w1[:, 0] / w1[:, 1].
    s1, s2 = (1, 2) if shift == 1 else (-2, -1)
    d1, d2 = (s1 * W) % HW, (s2 * W) % HW

    out = pl.pallas_call(
        functools.partial(_fused_kernel, d1=d1, d2=d2),
        out_shape=jax.ShapeDtypeStruct((C_OUT, LANES), jnp.float32),
        grid=(C_OUT // C_TILE,),
        in_specs=[
            pl.BlockSpec((C_IN, LANES), lambda i: (0, 0)),        # x: resident
            pl.BlockSpec((K, C_TILE, C_IN), lambda i: (0, i, 0)),  # w2 tile
            pl.BlockSpec((C_TILE, 2), lambda i: (i, 0)),           # w1 tile
        ],
        out_specs=pl.BlockSpec((C_TILE, LANES), lambda i: (i, 0)),
        compiler_params=pltpu.CompilerParams(
            dimension_semantics=("parallel",)),
        cost_estimate=pl.CostEstimate(
            flops=2 * C_OUT * (K * C_IN) * LANES,
            transcendentals=0,
            bytes_accessed=(K * C_OUT * C_IN * 2      # w2 bf16
                            + C_IN * LANES * 4        # x f32
                            + C_OUT * 2 * 4           # w1 f32
                            + C_OUT * LANES * 4)),    # out f32
    )(xpad, w2t, w1f)

    return out[:, :HW].reshape(1, C_OUT, H, W)


def forward(x, w1, w2, shift=SHIFT_DIRECTION):
    # Convenience wrapper; for repeated calls prepare the weights once (see __main__).
    w1f, w2t = _prepare_weights(w1, w2)
    return _forward_impl(x, w1f, w2t, shift=shift)


def reference(x, w1, w2, shift):
    # Literal transcription of the PyTorch forward (for correctness check).
    hp = jax.lax.Precision.HIGHEST
    t3 = x.reshape(1, C_IN * H, W, 1)
    padded = jnp.pad(t3, ((0, 0), (0, 0), (1, 1), (0, 0)))
    cols = jnp.stack([padded[:, :, k:k + W, 0] for k in range(K)], axis=2)  # (1,1792,3,7)
    t3u = cols.reshape(1, C_IN * H * K, W)   # == F.unfold(t3, (3,1), padding=(1,0))
    t3r = t3u.reshape(1, C_IN, H, K, W)
    t4 = jnp.einsum('ljnkm,ijk->linm', t3r, w2, precision=hp)
    t5 = jnp.einsum('kiml,ij->kimjl', t4, w1, precision=hp)
    t6 = jnp.roll(t5, shift, axis=2)
    t6 = t6.reshape(1, C_OUT, 2 * H, W)
    t6 = jnp.roll(t6, shift, axis=2)
    t6 = t6.reshape(1, C_OUT, H, 2, W)
    return jnp.sum(t6, axis=3)


if __name__ == "__main__":
    key = jax.random.PRNGKey(0)
    kx, k1, k2 = jax.random.split(key, 3)
    # Deterministic parameters (shapes from the module's __init__).
    w1 = jax.random.normal(k1, (C_OUT, 2), dtype=jnp.float32)        # weights[0]
    w2 = jax.random.normal(k2, (C_OUT, C_IN, K), dtype=jnp.float32)  # weights[1]
    # Input consistent with the hard-coded reshape (1, 1792, 7, 1): 256*7*7 elements.
    x = jax.random.normal(kx, (1, C_IN, H, W), dtype=jnp.float32)

    # Weight-only prep computed once, outside the per-call path.
    w1f, w2t = _prepare_weights(w1, w2)

    y = _forward_impl(x, w1f, w2t, shift=SHIFT_DIRECTION)
    jax.block_until_ready(y)
    assert y.shape == (1, C_OUT, H, W), y.shape

    # Validate BOTH shift directions against the literal torch transcription.
    # Tolerance is scale-relative: matmul operands are bf16 (f32 accumulation),
    # so the error scales with the ~N(0, sqrt(768)) activations, not per-element.
    for s in (1, -1):
        ys = _forward_impl(x, w1f, w2t, shift=s)
        rs = reference(x, w1, w2, s)
        err = float(jnp.max(jnp.abs(ys - rs)))
        scale = float(jnp.max(jnp.abs(rs)))
        assert err <= 2e-2 * scale + 1e-3, (s, err, scale)

    print("KERNEL_OK")
</pallas_src>

<mosaic_0001>
module attributes {stable_mosaic.version = 11 : i64} {
  func.func @_fused_kernel(%arg0: i32, %arg1: memref<256x128xf32, #tpu.memory_space<vmem>>, %arg2: memref<3x256x256xbf16, #tpu.memory_space<vmem>>, %arg3: memref<256x2xf32, #tpu.memory_space<vmem>>, %arg4: memref<256x128xf32, #tpu.memory_space<vmem>>) attributes {dimension_semantics = [#tpu.dimension_semantics<parallel>], iteration_bounds = array<i64: 2>, scalar_prefetch = 0 : i64, scratch_operands = 0 : i64, tpu.core_type = #tpu.core_type<tc>, window_params = [{pipeline_mode = #tpu.pipeline_mode<synchronous>, transform_indices = @transform_0, window_bounds = array<i64: 256, 128>}, {transform_indices = @transform_1, window_bounds = array<i64: 3, 256, 256>}, {transform_indices = @transform_2, window_bounds = array<i64: 256, 2>}, {transform_indices = @transform_3, window_bounds = array<i64: 256, 128>}]} {
    %c0 = arith.constant 0 : index
    %c0_0 = arith.constant 0 : index
    %0 = vector.load %arg1[%c0, %c0_0] : memref<256x128xf32, #tpu.memory_space<vmem>>, vector<256x128xf32>
    %1 = tpu.iota {dimensions = array<i32: 1>} : vector<256x128xi32>
    %c49_i32 = arith.constant 49 : i32
    %2 = vector.broadcast %c49_i32 : i32 to vector<256x128xi32>
    %3 = arith.cmpi slt, %1, %2 : vector<256x128xi32>
    %cst = arith.constant 0.000000e+00 : f32
    %4 = vector.broadcast %cst : f32 to vector<256x128xf32>
    %c7_i32 = arith.constant 7 : i32
    %c0_i32 = arith.constant 0 : i32
    %5 = arith.cmpi eq, %c7_i32, %c0_i32 : i32
    %c1_i32 = arith.constant 1 : i32
    %6 = arith.select %5, %c1_i32, %c7_i32 : i32
    %7 = vector.broadcast %6 : i32 to vector<256x128xi32>
    %8 = arith.remsi %1, %7 : vector<256x128xi32>
    %c0_i32_1 = arith.constant 0 : i32
    %9 = vector.broadcast %c0_i32_1 : i32 to vector<256x128xi32>
    %10 = arith.cmpi ne, %8, %9 : vector<256x128xi32>
    %c0_i32_2 = arith.constant 0 : i32
    %11 = vector.broadcast %c0_i32_2 : i32 to vector<256x128xi32>
    %12 = arith.cmpi slt, %8, %11 : vector<256x128xi32>
    %c0_i32_3 = arith.constant 0 : i32
    %13 = arith.cmpi slt, %6, %c0_i32_3 : i32
    %14 = vector.broadcast %13 : i1 to vector<256x128xi1>
    %15 = vector.broadcast %14 : vector<256x128xi1> to vector<256x128xi1>
    %16 = arith.xori %12, %15 : vector<256x128xi1>
    %17 = arith.andi %16, %10 : vector<256x128xi1>
    %18 = vector.broadcast %6 : i32 to vector<256x128xi32>
    %19 = arith.addi %8, %18 : vector<256x128xi32>
    %20 = arith.select %17, %19, %8 : vector<256x128xi1>, vector<256x128xi32>
    %c0_i32_4 = arith.constant 0 : i32
    %21 = vector.broadcast %c0_i32_4 : i32 to vector<256x128xi32>
    %22 = arith.cmpi ne, %20, %21 : vector<256x128xi32>
    %23 = arith.andi %22, %3 : vector<256x128xi1>
    %c1_i32_5 = arith.constant 1 : i32
    %24 = tpu.dynamic_rotate %0 by %c1_i32_5 dim 1 : vector<256x128xf32>, i32 -> vector<256x128xf32>
    %25 = arith.select %23, %24, %4 : vector<256x128xi1>, vector<256x128xf32>
    %c7_i32_6 = arith.constant 7 : i32
    %c0_i32_7 = arith.constant 0 : i32
    %26 = arith.cmpi eq, %c7_i32_6, %c0_i32_7 : i32
    %c1_i32_8 = arith.constant 1 : i32
    %27 = arith.select %26, %c1_i32_8, %c7_i32_6 : i32
    %28 = vector.broadcast %27 : i32 to vector<256x128xi32>
    %29 = arith.remsi %1, %28 : vector<256x128xi32>
    %c0_i32_9 = arith.constant 0 : i32
    %30 = vector.broadcast %c0_i32_9 : i32 to vector<256x128xi32>
    %31 = arith.cmpi ne, %29, %30 : vector<256x128xi32>
    %c0_i32_10 = arith.constant 0 : i32
    %32 = vector.broadcast %c0_i32_10 : i32 to vector<256x128xi32>
    %33 = arith.cmpi slt, %29, %32 : vector<256x128xi32>
    %c0_i32_11 = arith.constant 0 : i32
    %34 = arith.cmpi slt, %27, %c0_i32_11 : i32
    %35 = vector.broadcast %34 : i1 to vector<256x128xi1>
    %36 = vector.broadcast %35 : vector<256x128xi1> to vector<256x128xi1>
    %37 = arith.xori %33, %36 : vector<256x128xi1>
    %38 = arith.andi %37, %31 : vector<256x128xi1>
    %39 = vector.broadcast %27 : i32 to vector<256x128xi32>
    %40 = arith.addi %29, %39 : vector<256x128xi32>
    %41 = arith.select %38, %40, %29 : vector<256x128xi1>, vector<256x128xi32>
    %c6_i32 = arith.constant 6 : i32
    %42 = vector.broadcast %c6_i32 : i32 to vector<256x128xi32>
    %43 = arith.cmpi ne, %41, %42 : vector<256x128xi32>
    %44 = arith.andi %43, %3 : vector<256x128xi1>
    %c127_i32 = arith.constant 127 : i32
    %45 = tpu.dynamic_rotate %0 by %c127_i32 dim 1 : vector<256x128xf32>, i32 -> vector<256x128xf32>
    %46 = arith.select %44, %45, %4 : vector<256x128xi1>, vector<256x128xf32>
    %c0_12 = arith.constant 0 : index
    %c0_13 = arith.constant 0 : index
    %c0_14 = arith.constant 0 : index
    %47 = vector.load %arg2[%c0_12, %c0_13, %c0_14] : memref<3x256x256xbf16, #tpu.memory_space<vmem>>, vector<1x256x256xbf16>
    %48 = vector.shape_cast %47 : vector<1x256x256xbf16> to vector<256x256xbf16>
    %49 = arith.truncf %25 : vector<256x128xf32> to vector<256x128xbf16>
    %cst_15 = arith.constant dense<0.000000e+00> : vector<256x128xf32>
    %50 = tpu.matmul %48, %49, %cst_15 {dimension_numbers = #tpu.dot_dimension_numbers<[1], [0], [0], [1], [0, 0, 1, 1], [], []>} : vector<256x256xbf16>, vector<256x128xbf16>, vector<256x128xf32> -> vector<256x128xf32>
    %c1 = arith.constant 1 : index
    %c0_16 = arith.constant 0 : index
    %c0_17 = arith.constant 0 : index
    %51 = vector.load %arg2[%c1, %c0_16, %c0_17] : memref<3x256x256xbf16, #tpu.memory_space<vmem>>, vector<1x256x256xbf16>
    %52 = vector.shape_cast %51 : vector<1x256x256xbf16> to vector<256x256xbf16>
    %53 = arith.truncf %0 : vector<256x128xf32> to vector<256x128xbf16>
    %cst_18 = arith.constant dense<0.000000e+00> : vector<256x128xf32>
    %54 = tpu.matmul %52, %53, %cst_18 {dimension_numbers = #tpu.dot_dimension_numbers<[1], [0], [0], [1], [0, 0, 1, 1], [], []>} : vector<256x256xbf16>, vector<256x128xbf16>, vector<256x128xf32> -> vector<256x128xf32>
    %55 = arith.addf %50, %54 : vector<256x128xf32>
    %c2 = arith.constant 2 : index
    %c0_19 = arith.constant 0 : index
    %c0_20 = arith.constant 0 : index
    %56 = vector.load %arg2[%c2, %c0_19, %c0_20] : memref<3x256x256xbf16, #tpu.memory_space<vmem>>, vector<1x256x256xbf16>
    %57 = vector.shape_cast %56 : vector<1x256x256xbf16> to vector<256x256xbf16>
    %58 = arith.truncf %46 : vector<256x128xf32> to vector<256x128xbf16>
    %cst_21 = arith.constant dense<0.000000e+00> : vector<256x128xf32>
    %59 = tpu.matmul %57, %58, %cst_21 {dimension_numbers = #tpu.dot_dimension_numbers<[1], [0], [0], [1], [0, 0, 1, 1], [], []>} : vector<256x256xbf16>, vector<256x128xbf16>, vector<256x128xf32> -> vector<256x128xf32>
    %60 = arith.addf %55, %59 : vector<256x128xf32>
    %61 = tpu.iota {dimensions = array<i32: 1>} : vector<256x128xi32>
    %c0_22 = arith.constant 0 : index
    %c0_23 = arith.constant 0 : index
    %62 = vector.load %arg3[%c0_22, %c0_23] : memref<256x2xf32, #tpu.memory_space<vmem>>, vector<256x1xf32>
    %c7_i32_24 = arith.constant 7 : i32
    %63 = tpu.dynamic_rotate %60 by %c7_i32_24 dim 1 : vector<256x128xf32>, i32 -> vector<256x128xf32>
    %c86_i32 = arith.constant 86 : i32
    %64 = tpu.dynamic_rotate %60 by %c86_i32 dim 1 : vector<256x128xf32>, i32 -> vector<256x128xf32>
    %c7_i32_25 = arith.constant 7 : i32
    %65 = vector.broadcast %c7_i32_25 : i32 to vector<256x128xi32>
    %66 = arith.cmpi sge, %61, %65 : vector<256x128xi32>
    %67 = arith.select %66, %63, %64 : vector<256x128xi1>, vector<256x128xf32>
    %68 = vector.broadcast %62 : vector<256x1xf32> to vector<256x128xf32>
    %69 = arith.mulf %68, %67 : vector<256x128xf32>
    %c0_26 = arith.constant 0 : index
    %c1_27 = arith.constant 1 : index
    %70 = vector.load %arg3[%c0_26, %c1_27] : memref<256x2xf32, #tpu.memory_space<vmem>>, vector<256x1xf32>
    %c14_i32 = arith.constant 14 : i32
    %71 = tpu.dynamic_rotate %60 by %c14_i32 dim 1 : vector<256x128xf32>, i32 -> vector<256x128xf32>
    %c93_i32 = arith.constant 93 : i32
    %72 = tpu.dynamic_rotate %60 by %c93_i32 dim 1 : vector<256x128xf32>, i32 -> vector<256x128xf32>
    %c14_i32_28 = arith.constant 14 : i32
    %73 = vector.broadcast %c14_i32_28 : i32 to vector<256x128xi32>
    %74 = arith.cmpi sge, %61, %73 : vector<256x128xi32>
    %75 = arith.select %74, %71, %72 : vector<256x128xi1>, vector<256x128xf32>
    %76 = vector.broadcast %70 : vector<256x1xf32> to vector<256x128xf32>
    %77 = arith.mulf %76, %75 : vector<256x128xf32>
    %78 = arith.addf %69, %77 : vector<256x128xf32>
    %c0_29 = arith.constant 0 : index
    %c0_30 = arith.constant 0 : index
    %79 = vector.load %arg4[%c0_29, %c0_30] : memref<256x128xf32, #tpu.memory_space<vmem>>, vector<256x128xf32>
    tpu.vector_store %arg4[%c0_29, %c0_30], %78 {strides = array<i32>} : memref<256x128xf32, #tpu.memory_space<vmem>>, vector<256x128xf32>,
    return
  }
  func.func @transform_0(%arg0: i32) -> (i32, i32) {
    %c0_i32 = arith.constant 0 : i32
    %c0_i32_0 = arith.constant 0 : i32
    %c0_i32_1 = arith.constant 0 : i32
    return %c0_i32, %c0_i32_0 : i32, i32
  }
  func.func @transform_1(%arg0: i32) -> (i32, i32, i32) {
    %c0_i32 = arith.constant 0 : i32
    %c0_i32_0 = arith.constant 0 : i32
    %c0_i32_1 = arith.constant 0 : i32
    return %c0_i32, %arg0, %c0_i32_0 : i32, i32, i32
  }
  func.func @transform_2(%arg0: i32) -> (i32, i32) {
    %c0_i32 = arith.constant 0 : i32
    %c0_i32_0 = arith.constant 0 : i32
    return %arg0, %c0_i32 : i32, i32
  }
  func.func @transform_3(%arg0: i32) -> (i32, i32) {
    %c0_i32 = arith.constant 0 : i32
    %c0_i32_0 = arith.constant 0 : i32
    return %arg0, %c0_i32 : i32, i32
  }
}

</mosaic_0001>

<llo_original>
// kernel: _forward_impl.1
$region0: #{_forward_impl.1}
  #allocation0 [shape = 'u32[]', space=smem, size = 0x4, offset = 0x4, fixed_abs, tag = 'smem constant byte address 0x4 - core index']
  #allocation1 [shape = 'u32[144,128]{1,0:T(1,128)}', space=vmem, size = 0x12000, scoped, tag = 'internal scratch']
  %s0 = inlined_call_operand.vmem [shape: f32[256,128], index: 0, kind: input, shape index: {}]
  %s1 = inlined_call_operand.vmem [shape: bf16[3,512,256], index: 1, kind: input, shape index: {}]
  %s2 = inlined_call_operand.vmem [shape: f32[512,2], index: 2, kind: input, shape index: {}]
  %s3 = inlined_call_operand.vmem [shape: f32[512,128], index: 3, kind: output, shape index: {}]
  %s4 = sld [smem:[#allocation0]]
  $region83: #{_forward_impl.1} parent=0
    _
  %s6 = ssub.s32 1, %s4
  %s7 = scalar_select 0, %s6, %s4
  $region1: #{_forward_impl.1} parent=0
    #allocation2 [shape = 'u8[786432]{0}', space=vmem, size = 0xc0000, scoped, tag = 'input window, operand 1']
    loop: start=0, step=1, limit=4
    $region2: #{_forward_impl.1} parent=1 // loop_pre_header
      _
    $region3: #{_forward_impl.1} parent=1 // loop_header
      %s9 = sphi 0, %s13
      %p10 = scmp.ge.s32.totalorder %s9, 4
      %s17 = sphi 0, %s17
      %s19 = sphi 0, %s17
      %s20 = sphi 0, %s19
      %s34 = sphi 0, %s20
      %s40 = sphi 0, %s42
      %s43 = sphi 0, %s40
      %s44 = sphi 0, %s43
      %s60 = sphi 0, %s44
      %s66 = sphi 0, %s68
      %s69 = sphi 0, %s66
      %s70 = sphi 0, %s69
      %s86 = sphi 0, %s70
      %s92 = sphi 0, %s94
      %s95 = sphi 0, %s92
      %s96 = sphi 0, %s95
      %s112 = sphi 0, %s96
    $region4: #{_forward_impl.1} parent=1 // loop_header_branch
      %12 = sbr.rel (%p10) target = $region8
    $region5: #{_forward_impl.1} parent=1 // loop_body
      %s14 = ssub.s32 %s9, 1
      %s15 = ssub.s32 %s9, 2
      %s16 = sadd.s32 %s9, 1
      %s18 = sadd.s32 %s17, 1
      %p21 = scmp.eq.s32.totalorder %s9, 1
      %p22 = scmp.ne.s32.totalorder %s17, %s19
      %p23 = scmp.eq.s32.totalorder %s9, 0
      %p24 = por %p22, %p23
      %p25 = scmp.ne.s32.totalorder %s17, %s19
      %p26 = scmp.eq.s32.totalorder %s14, 1
      %p27 = por %p25, %p26
      %p28 = scmp.ne.s32.totalorder %s19, %s20
      %p29 = scmp.eq.s32.totalorder %s14, 0
      %p30 = por %p28, %p29
      %p31 = scmp.ne.s32.totalorder %s19, %s20
      %p32 = scmp.eq.s32.totalorder %s15, 1
      %p33 = por %p31, %p32
      %p35 = scmp.ne.s32.totalorder %s20, %s34
      %p36 = scmp.eq.s32.totalorder %s15, 0
      %p37 = por %p35, %p36
      %s38 = ssub.s32 %s9, %s16
      %p39 = scmp.eq.s32.totalorder %s38, 0
      %s41 = sadd.s32 %s40, 1
      %s42 = scalar_select %p39, %s40, %s41
      %p45 = pneg %p39
      %p46 = scmp.eq.s32.totalorder %s9, 1
      %p47 = por %p45, %p46
      %p48 = scmp.ne.s32.totalorder %s40, %s43
      %p49 = scmp.eq.s32.totalorder %s9, 0
      %p50 = por %p48, %p49
      %p51 = scmp.ne.s32.totalorder %s40, %s43
      %p52 = scmp.eq.s32.totalorder %s14, 1
      %p53 = por %p51, %p52
      %p54 = scmp.ne.s32.totalorder %s43, %s44
      %p55 = scmp.eq.s32.totalorder %s14, 0
      %p56 = por %p54, %p55
      %p57 = scmp.ne.s32.totalorder %s43, %s44
      %p58 = scmp.eq.s32.totalorder %s15, 1
      %p59 = por %p57, %p58
      %p61 = scmp.ne.s32.totalorder %s44, %s60
      %p62 = scmp.eq.s32.totalorder %s15, 0
      %p63 = por %p61, %p62
      %s64 = ssub.s32 %s9, %s16
      %p65 = scmp.eq.s32.totalorder %s64, 0
      %s67 = sadd.s32 %s66, 1
      %s68 = scalar_select %p65, %s66, %s67
      %p71 = pneg %p65
      %p72 = scmp.eq.s32.totalorder %s9, 1
      %p73 = por %p71, %p72
      %p74 = scmp.ne.s32.totalorder %s66, %s69
      %p75 = scmp.eq.s32.totalorder %s9, 0
      %p76 = por %p74, %p75
      %p77 = scmp.ne.s32.totalorder %s66, %s69
      %p78 = scmp.eq.s32.totalorder %s14, 1
      %p79 = por %p77, %p78
      %p80 = scmp.ne.s32.totalorder %s69, %s70
      %p81 = scmp.eq.s32.totalorder %s14, 0
      %p82 = por %p80, %p81
      %p83 = scmp.ne.s32.totalorder %s69, %s70
      %p84 = scmp.eq.s32.totalorder %s15, 1
      %p85 = por %p83, %p84
      %p87 = scmp.ne.s32.totalorder %s70, %s86
      %p88 = scmp.eq.s32.totalorder %s15, 0
      %p89 = por %p87, %p88
      %s90 = ssub.s32 %s9, %s16
      %p91 = scmp.eq.s32.totalorder %s90, 0
      %s93 = sadd.s32 %s92, 1
      %s94 = scalar_select %p91, %s92, %s93
      %p97 = pneg %p91
      %p98 = scmp.eq.s32.totalorder %s9, 1
      %p99 = por %p97, %p98
      %p100 = scmp.ne.s32.totalorder %s92, %s95
      %p101 = scmp.eq.s32.totalorder %s9, 0
      %p102 = por %p100, %p101
      %p103 = scmp.ne.s32.totalorder %s92, %s95
      %p104 = scmp.eq.s32.totalorder %s14, 1
      %p105 = por %p103, %p104
      %p106 = scmp.ne.s32.totalorder %s95, %s96
      %p107 = scmp.eq.s32.totalorder %s14, 0
      %p108 = por %p106, %p107
      %p109 = scmp.ne.s32.totalorder %s95, %s96
      %p110 = scmp.eq.s32.totalorder %s15, 1
      %p111 = por %p109, %p110
      %p113 = scmp.ne.s32.totalorder %s96, %s112
      %p114 = scmp.eq.s32.totalorder %s15, 0
      %p115 = por %p113, %p114
      %p116 = scmp.le.s32.totalorder 1, %s9
      %p117 = scmp.lt.s32.totalorder %s9, 3
      %p118 = pnand %p116, %p117
      %p119 = pneg %p118
      // Predicated region
      $region9: #{_forward_impl.1} parent=5 // pred_check
        _
      $region10: #{_forward_impl.1} parent=5 // pred_check_branch
        %121 = sbr.rel (%p118) target = $region12
      $region11: #{_forward_impl.1} parent=5 // pred_region
        %s122 = ssub.s32 %s9, 1
        // Predicated region
        $region13: #{_forward_impl.1} parent=11 // pred_check
          %p123 = pneg %p30
        $region14: #{_forward_impl.1} parent=11 // pred_check_branch
          %125 = sbr.rel (%p123) target = $region16
        $region15: #{_forward_impl.1} parent=11 // pred_region
          _
        $region16: #{_forward_impl.1} parent=11 // pred_fallthru
          _
      $region12: #{_forward_impl.1} parent=5 // pred_fallthru
        _
      %p126 = scmp.lt.s32.totalorder %s9, 2
      // Predicated region
      $region17: #{_forward_impl.1} parent=5 // pred_check
        %p127 = pneg %p126
      $region18: #{_forward_impl.1} parent=5 // pred_check_branch
        %129 = sbr.rel (%p127) target = $region20
      $region19: #{_forward_impl.1} parent=5 // pred_region
        // Predicated region
        $region21: #{_forward_impl.1} parent=19 // pred_check
          %p130 = pneg %p50
        $region22: #{_forward_impl.1} parent=19 // pred_check_branch
          %132 = sbr.rel (%p130) target = $region24
        $region23: #{_forward_impl.1} parent=19 // pred_region
          %s133 = sand.u32 %s40, 1
          %s134 = sand.u32 %s40, 1
          %s135 = smul.addr %s134, 768
          %s136 = scalar_lea.vmem [#allocation2], %s135
          %s137 = smul.u32 32, %s9
          %s138 = smul.addr %s137, 2
          %s139 = smul.addr %s138, 4
          %s140 = scalar_lea.vmem %s1, %s139
          // Predicated region
          $region25: #{_forward_impl.1} parent=23 // pred_check
            _
          $region26: #{_forward_impl.1} parent=23 // pred_check_branch
            %142 = sbr.rel (0) target = $region28
          $region27: #{_forward_impl.1} parent=23 // pred_region
            // Predicated region
            $region29: #{_forward_impl.1} parent=27 // pred_check
              _
            $region30: #{_forward_impl.1} parent=27 // pred_check_branch
              %144 = sbr.rel (0) target = $region32
            $region31: #{_forward_impl.1} parent=27 // pred_region
              // Predicated region
              $region44: #{_forward_impl.1} parent=31 // pred_check
                _
              $region45: #{_forward_impl.1} parent=31 // pred_check_branch
                %349 = sbr.rel (0) target = $region47
              $region46: #{_forward_impl.1} parent=31 // pred_region
                loop: start=0, step=1, limit=1
                $region48: #{_forward_impl.1} parent=46 // loop_pre_header
                  _
                $region49: #{_forward_impl.1} parent=46 // loop_header
                  %s351 = sphi 0, %s355
                  %p352 = scmp.ge.s32.totalorder %s351, 1
                  %s356 = sphi %s140, %s140
                  %s357 = sphi %s136, %s136
                $region50: #{_forward_impl.1} parent=46 // loop_header_branch
                  %354 = sbr.rel (%p352) target = $region54
                $region51: #{_forward_impl.1} parent=46 // loop_body
                  %v358 = vld [vmem:[%s356] sm:$0xff]
                  %359 = vst [vmem:[%s357] sm:$0xff] %v358
                  %v360 = vld [vmem:[%s356 + $0x8] sm:$0xff]
                  %361 = vst [vmem:[%s357 + $0x8] sm:$0xff] %v360
                  %v362 = vld [vmem:[%s356 + $0x10] sm:$0xff]
                  %363 = vst [vmem:[%s357 + $0x10] sm:$0xff] %v362
                  %v364 = vld [vmem:[%s356 + $0x18] sm:$0xff]
                  %365 = vst [vmem:[%s357 + $0x18] sm:$0xff] %v364
                  %v366 = vld [vmem:[%s356 + $0x20] sm:$0xff]
                  %367 = vst [vmem:[%s357 + $0x20] sm:$0xff] %v366
                  %v368 = vld [vmem:[%s356 + $0x28] sm:$0xff]
                  %369 = vst [vmem:[%s357 + $0x28] sm:$0xff] %v368
                  %v370 = vld [vmem:[%s356 + $0x30] sm:$0xff]
                  %371 = vst [vmem:[%s357 + $0x30] sm:$0xff] %v370
                  %v372 = vld [vmem:[%s356 + $0x38] sm:$0xff]
                  %373 = vst [vmem:[%s357 + $0x38] sm:$0xff] %v372
                  %v374 = vld [vmem:[%s356 + $0x40] sm:$0xff]
                  %375 = vst [vmem:[%s357 + $0x40] sm:$0xff] %v374
                  %v376 = vld [vmem:[%s356 + $0x48] sm:$0xff]
                  %377 = vst [vmem:[%s357 + $0x48] sm:$0xff] %v376
                  %v378 = vld [vmem:[%s356 + $0x50] sm:$0xff]
                  %379 = vst [vmem:[%s357 + $0x50] sm:$0xff] %v378
                  %v380 = vld [vmem:[%s356 + $0x58] sm:$0xff]
                  %381 = vst [vmem:[%s357 + $0x58] sm:$0xff] %v380
                  %v382 = vld [vmem:[%s356 + $0x60] sm:$0xff]
                  %383 = vst [vmem:[%s357 + $0x60] sm:$0xff] %v382
                  %v384 = vld [vmem:[%s356 + $0x68] sm:$0xff]
                  %385 = vst [vmem:[%s357 + $0x68] sm:$0xff] %v384
                  %v386 = vld [vmem:[%s356 + $0x70] sm:$0xff]
                  %387 = vst [vmem:[%s357 + $0x70] sm:$0xff] %v386
                  %v388 = vld [vmem:[%s356 + $0x78] sm:$0xff]
                  %389 = vst [vmem:[%s357 + $0x78] sm:$0xff] %v388
                  %v390 = vld [vmem:[%s356 + $0x80] sm:$0xff]
                  %391 = vst [vmem:[%s357 + $0x80] sm:$0xff] %v390
                  %v392 = vld [vmem:[%s356 + $0x88] sm:$0xff]
                  %393 = vst [vmem:[%s357 + $0x88] sm:$0xff] %v392
                  %v394 = vld [vmem:[%s356 + $0x90] sm:$0xff]
                  %395 = vst [vmem:[%s357 + $0x90] sm:$0xff] %v394
                  %v396 = vld [vmem:[%s356 + $0x98] sm:$0xff]
                  %397 = vst [vmem:[%s357 + $0x98] sm:$0xff] %v396
                  %v398 = vld [vmem:[%s356 + $0xa0] sm:$0xff]
                  %399 = vst [vmem:[%s357 + $0xa0] sm:$0xff] %v398
                  %v400 = vld [vmem:[%s356 + $0xa8] sm:$0xff]
                  %401 = vst [vmem:[%s357 + $0xa8] sm:$0xff] %v400
                  %v402 = vld [vmem:[%s356 + $0xb0] sm:$0xff]
                  %403 = vst [vmem:[%s357 + $0xb0] sm:$0xff] %v402
                  %v404 = vld [vmem:[%s356 + $0xb8] sm:$0xff]
                  %405 = vst [vmem:[%s357 + $0xb8] sm:$0xff] %v404
                  %v406 = vld [vmem:[%s356 + $0xc0] sm:$0xff]
                  %407 = vst [vmem:[%s357 + $0xc0] sm:$0xff] %v406
                  %v408 = vld [vmem:[%s356 + $0xc8] sm:$0xff]
                  %409 = vst [vmem:[%s357 + $0xc8] sm:$0xff] %v408
                  %v410 = vld [vmem:[%s356 + $0xd0] sm:$0xff]
                  %411 = vst [vmem:[%s357 + $0xd0] sm:$0xff] %v410
                  %v412 = vld [vmem:[%s356 + $0xd8] sm:$0xff]
                  %413 = vst [vmem:[%s357 + $0xd8] sm:$0xff] %v412
                  %v414 = vld [vmem:[%s356 + $0xe0] sm:$0xff]
                  %415 = vst [vmem:[%s357 + $0xe0] sm:$0xff] %v414
                  %v416 = vld [vmem:[%s356 + $0xe8] sm:$0xff]
                  %417 = vst [vmem:[%s357 + $0xe8] sm:$0xff] %v416
                  %v418 = vld [vmem:[%s356 + $0xf0] sm:$0xff]
                  %419 = vst [vmem:[%s357 + $0xf0] sm:$0xff] %v418
                  %v420 = vld [vmem:[%s356 + $0xf8] sm:$0xff]
                  %421 = vst [vmem:[%s357 + $0xf8] sm:$0xff] %v420
                  %v422 = vld [vmem:[%s356 + $0x200] sm:$0xff]
                  %423 = vst [vmem:[%s357 + $0x100] sm:$0xff] %v422
                  %v424 = vld [vmem:[%s356 + $0x208] sm:$0xff]
                  %425 = vst [vmem:[%s357 + $0x108] sm:$0xff] %v424
                  %v426 = vld [vmem:[%s356 + $0x210] sm:$0xff]
                  %427 = vst [vmem:[%s357 + $0x110] sm:$0xff] %v426
                  %v428 = vld [vmem:[%s356 + $0x218] sm:$0xff]
                  %429 = vst [vmem:[%s357 + $0x118] sm:$0xff] %v428
                  %v430 = vld [vmem:[%s356 + $0x220] sm:$0xff]
                  %431 = vst [vmem:[%s357 + $0x120] sm:$0xff] %v430
                  %v432 = vld [vmem:[%s356 + $0x228] sm:$0xff]
                  %433 = vst [vmem:[%s357 + $0x128] sm:$0xff] %v432
                  %v434 = vld [vmem:[%s356 + $0x230] sm:$0xff]
                  %435 = vst [vmem:[%s357 + $0x130] sm:$0xff] %v434
                  %v436 = vld [vmem:[%s356 + $0x238] sm:$0xff]
                  %437 = vst [vmem:[%s357 + $0x138] sm:$0xff] %v436
                  %v438 = vld [vmem:[%s356 + $0x240] sm:$0xff]
                  %439 = vst [vmem:[%s357 + $0x140] sm:$0xff] %v438
                  %v440 = vld [vmem:[%s356 + $0x248] sm:$0xff]
                  %441 = vst [vmem:[%s357 + $0x148] sm:$0xff] %v440
                  %v442 = vld [vmem:[%s356 + $0x250] sm:$0xff]
                  %443 = vst [vmem:[%s357 + $0x150] sm:$0xff] %v442
                  %v444 = vld [vmem:[%s356 + $0x258] sm:$0xff]
                  %445 = vst [vmem:[%s357 + $0x158] sm:$0xff] %v444
                  %v446 = vld [vmem:[%s356 + $0x260] sm:$0xff]
                  %447 = vst [vmem:[%s357 + $0x160] sm:$0xff] %v446
                  %v448 = vld [vmem:[%s356 + $0x268] sm:$0xff]
                  %449 = vst [vmem:[%s357 + $0x168] sm:$0xff] %v448
                  %v450 = vld [vmem:[%s356 + $0x270] sm:$0xff]
                  %451 = vst [vmem:[%s357 + $0x170] sm:$0xff] %v450
                  %v452 = vld [vmem:[%s356 + $0x278] sm:$0xff]
                  %453 = vst [vmem:[%s357 + $0x178] sm:$0xff] %v452
                  %v454 = vld [vmem:[%s356 + $0x280] sm:$0xff]
                  %455 = vst [vmem:[%s357 + $0x180] sm:$0xff] %v454
                  %v456 = vld [vmem:[%s356 + $0x288] sm:$0xff]
                  %457 = vst [vmem:[%s357 + $0x188] sm:$0xff] %v456
                  %v458 = vld [vmem:[%s356 + $0x290] sm:$0xff]
                  %459 = vst [vmem:[%s357 + $0x190] sm:$0xff] %v458
                  %v460 = vld [vmem:[%s356 + $0x298] sm:$0xff]
                  %461 = vst [vmem:[%s357 + $0x198] sm:$0xff] %v460
                  %v462 = vld [vmem:[%s356 + $0x2a0] sm:$0xff]
                  %463 = vst [vmem:[%s357 + $0x1a0] sm:$0xff] %v462
                  %v464 = vld [vmem:[%s356 + $0x2a8] sm:$0xff]
                  %465 = vst [vmem:[%s357 + $0x1a8] sm:$0xff] %v464
                  %v466 = vld [vmem:[%s356 + $0x2b0] sm:$0xff]
                  %467 = vst [vmem:[%s357 + $0x1b0] sm:$0xff] %v466
                  %v468 = vld [vmem:[%s356 + $0x2b8] sm:$0xff]
                  %469 = vst [vmem:[%s357 + $0x1b8] sm:$0xff] %v468
                  %v470 = vld [vmem:[%s356 + $0x2c0] sm:$0xff]
                  %471 = vst [vmem:[%s357 + $0x1c0] sm:$0xff] %v470
                  %v472 = vld [vmem:[%s356 + $0x2c8] sm:$0xff]
                  %473 = vst [vmem:[%s357 + $0x1c8] sm:$0xff] %v472
                  %v474 = vld [vmem:[%s356 + $0x2d0] sm:$0xff]
                  %475 = vst [vmem:[%s357 + $0x1d0] sm:$0xff] %v474
                  %v476 = vld [vmem:[%s356 + $0x2d8] sm:$0xff]
                  %477 = vst [vmem:[%s357 + $0x1d8] sm:$0xff] %v476
                  %v478 = vld [vmem:[%s356 + $0x2e0] sm:$0xff]
                  %479 = vst [vmem:[%s357 + $0x1e0] sm:$0xff] %v478
                  %v480 = vld [vmem:[%s356 + $0x2e8] sm:$0xff]
                  %481 = vst [vmem:[%s357 + $0x1e8] sm:$0xff] %v480
                  %v482 = vld [vmem:[%s356 + $0x2f0] sm:$0xff]
                  %483 = vst [vmem:[%s357 + $0x1f0] sm:$0xff] %v482
                  %v484 = vld [vmem:[%s356 + $0x2f8] sm:$0xff]
                  %485 = vst [vmem:[%s357 + $0x1f8] sm:$0xff] %v484
                  %v486 = vld [vmem:[%s356 + $0x400] sm:$0xff]
                  %487 = vst [vmem:[%s357 + $0x200] sm:$0xff] %v486
                  %v488 = vld [vmem:[%s356 + $0x408] sm:$0xff]
                  %489 = vst [vmem:[%s357 + $0x208] sm:$0xff] %v488
                  %v490 = vld [vmem:[%s356 + $0x410] sm:$0xff]
                  %491 = vst [vmem:[%s357 + $0x210] sm:$0xff] %v490
                  %v492 = vld [vmem:[%s356 + $0x418] sm:$0xff]
                  %493 = vst [vmem:[%s357 + $0x218] sm:$0xff] %v492
                  %v494 = vld [vmem:[%s356 + $0x420] sm:$0xff]
                  %495 = vst [vmem:[%s357 + $0x220] sm:$0xff] %v494
                  %v496 = vld [vmem:[%s356 + $0x428] sm:$0xff]
                  %497 = vst [vmem:[%s357 + $0x228] sm:$0xff] %v496
                  %v498 = vld [vmem:[%s356 + $0x430] sm:$0xff]
                  %499 = vst [vmem:[%s357 + $0x230] sm:$0xff] %v498
                  %v500 = vld [vmem:[%s356 + $0x438] sm:$0xff]
                  %501 = vst [vmem:[%s357 + $0x238] sm:$0xff] %v500
                  %v502 = vld [vmem:[%s356 + $0x440] sm:$0xff]
                  %503 = vst [vmem:[%s357 + $0x240] sm:$0xff] %v502
                  %v504 = vld [vmem:[%s356 + $0x448] sm:$0xff]
                  %505 = vst [vmem:[%s357 + $0x248] sm:$0xff] %v504
                  %v506 = vld [vmem:[%s356 + $0x450] sm:$0xff]
                  %507 = vst [vmem:[%s357 + $0x250] sm:$0xff] %v506
                  %v508 = vld [vmem:[%s356 + $0x458] sm:$0xff]
                  %509 = vst [vmem:[%s357 + $0x258] sm:$0xff] %v508
                  %v510 = vld [vmem:[%s356 + $0x460] sm:$0xff]
                  %511 = vst [vmem:[%s357 + $0x260] sm:$0xff] %v510
                  %v512 = vld [vmem:[%s356 + $0x468] sm:$0xff]
                  %513 = vst [vmem:[%s357 + $0x268] sm:$0xff] %v512
                  %v514 = vld [vmem:[%s356 + $0x470] sm:$0xff]
                  %515 = vst [vmem:[%s357 + $0x270] sm:$0xff] %v514
                  %v516 = vld [vmem:[%s356 + $0x478] sm:$0xff]
                  %517 = vst [vmem:[%s357 + $0x278] sm:$0xff] %v516
                  %v518 = vld [vmem:[%s356 + $0x480] sm:$0xff]
                  %519 = vst [vmem:[%s357 + $0x280] sm:$0xff] %v518
                  %v520 = vld [vmem:[%s356 + $0x488] sm:$0xff]
                  %521 = vst [vmem:[%s357 + $0x288] sm:$0xff] %v520
                  %v522 = vld [vmem:[%s356 + $0x490] sm:$0xff]
                  %523 = vst [vmem:[%s357 + $0x290] sm:$0xff] %v522
                  %v524 = vld [vmem:[%s356 + $0x498] sm:$0xff]
                  %525 = vst [vmem:[%s357 + $0x298] sm:$0xff] %v524
                  %v526 = vld [vmem:[%s356 + $0x4a0] sm:$0xff]
                  %527 = vst [vmem:[%s357 + $0x2a0] sm:$0xff] %v526
                  %v528 = vld [vmem:[%s356 + $0x4a8] sm:$0xff]
                  %529 = vst [vmem:[%s357 + $0x2a8] sm:$0xff] %v528
                  %v530 = vld [vmem:[%s356 + $0x4b0] sm:$0xff]
                  %531 = vst [vmem:[%s357 + $0x2b0] sm:$0xff] %v530
                  %v532 = vld [vmem:[%s356 + $0x4b8] sm:$0xff]
                  %533 = vst [vmem:[%s357 + $0x2b8] sm:$0xff] %v532
                  %v534 = vld [vmem:[%s356 + $0x4c0] sm:$0xff]
                  %535 = vst [vmem:[%s357 + $0x2c0] sm:$0xff] %v534
                  %v536 = vld [vmem:[%s356 + $0x4c8] sm:$0xff]
                  %537 = vst [vmem:[%s357 + $0x2c8] sm:$0xff] %v536
                  %v538 = vld [vmem:[%s356 + $0x4d0] sm:$0xff]
                  %539 = vst [vmem:[%s357 + $0x2d0] sm:$0xff] %v538
                  %v540 = vld [vmem:[%s356 + $0x4d8] sm:$0xff]
                  %541 = vst [vmem:[%s357 + $0x2d8] sm:$0xff] %v540
                  %v542 = vld [vmem:[%s356 + $0x4e0] sm:$0xff]
                  %543 = vst [vmem:[%s357 + $0x2e0] sm:$0xff] %v542
                  %v544 = vld [vmem:[%s356 + $0x4e8] sm:$0xff]
                  %545 = vst [vmem:[%s357 + $0x2e8] sm:$0xff] %v544
                  %v546 = vld [vmem:[%s356 + $0x4f0] sm:$0xff]
                  %547 = vst [vmem:[%s357 + $0x2f0] sm:$0xff] %v546
                  %v548 = vld [vmem:[%s356 + $0x4f8] sm:$0xff]
                  %549 = vst [vmem:[%s357 + $0x2f8] sm:$0xff] %v548
                $region52: #{_forward_impl.1} parent=46 // loop_footer
                  %s355 = sadd.s32 1, %s351
                $region53: #{_forward_impl.1} parent=46 // loop_footer_branch
                  %350 = sbr.rel target = $region49
                $region54: #{_forward_impl.1} parent=46 // loop_exit
                  _
              $region47: #{_forward_impl.1} parent=31 // pred_fallthru
                _
              // Predicated region
              $region55: #{_forward_impl.1} parent=31 // pred_check
                _
              $region56: #{_forward_impl.1} parent=31 // pred_check_branch
                %551 = sbr.rel target = $region58
              $region57: #{_forward_impl.1} parent=31 // pred_region
                _
              $region58: #{_forward_impl.1} parent=31 // pred_fallthru
                _
            $region32: #{_forward_impl.1} parent=27 // pred_fallthru
              _
            // Predicated region
            $region33: #{_forward_impl.1} parent=27 // pred_check
              _
            $region34: #{_forward_impl.1} parent=27 // pred_check_branch
              %146 = sbr.rel target = $region36
            $region35: #{_forward_impl.1} parent=27 // pred_region
              loop: start=0, step=1, limit=1
              $region37: #{_forward_impl.1} parent=35 // loop_pre_header
                _
              $region38: #{_forward_impl.1} parent=35 // loop_header
                %s149 = sphi 0, %s153
                %p150 = scmp.ge.s32.totalorder %s149, 1
                %s154 = sphi %s140, %s140
                %s155 = sphi %s136, %s136
              $region39: #{_forward_impl.1} parent=35 // loop_header_branch
                %152 = sbr.rel (%p150) target = $region43
              $region40: #{_forward_impl.1} parent=35 // loop_body
                %v156 = vld [vmem:[%s154] sm:$0xff]
                %157 = vst [vmem:[%s155] sm:$0xff] %v156
                %v158 = vld [vmem:[%s154 + $0x8] sm:$0xff]
                %159 = vst [vmem:[%s155 + $0x8] sm:$0xff] %v158
                %v160 = vld [vmem:[%s154 + $0x10] sm:$0xff]
                %161 = vst [vmem:[%s155 + $0x10] sm:$0xff] %v160
                %v162 = vld [vmem:[%s154 + $0x18] sm:$0xff]
                %163 = vst [vmem:[%s155 + $0x18] sm:$0xff] %v162
                %v164 = vld [vmem:[%s154 + $0x20] sm:$0xff]
                %165 = vst [vmem:[%s155 + $0x20] sm:$0xff] %v164
                %v166 = vld [vmem:[%s154 + $0x28] sm:$0xff]
                %167 = vst [vmem:[%s155 + $0x28] sm:$0xff] %v166
                %v168 = vld [vmem:[%s154 + $0x30] sm:$0xff]
                %169 = vst [vmem:[%s155 + $0x30] sm:$0xff] %v168
                %v170 = vld [vmem:[%s154 + $0x38] sm:$0xff]
                %171 = vst [vmem:[%s155 + $0x38] sm:$0xff] %v170
                %v172 = vld [vmem:[%s154 + $0x40] sm:$0xff]
                %173 = vst [vmem:[%s155 + $0x40] sm:$0xff] %v172
                %v174 = vld [vmem:[%s154 + $0x48] sm:$0xff]
                %175 = vst [vmem:[%s155 + $0x48] sm:$0xff] %v174
                %v176 = vld [vmem:[%s154 + $0x50] sm:$0xff]
                %177 = vst [vmem:[%s155 + $0x50] sm:$0xff] %v176
                %v178 = vld [vmem:[%s154 + $0x58] sm:$0xff]
                %179 = vst [vmem:[%s155 + $0x58] sm:$0xff] %v178
                %v180 = vld [vmem:[%s154 + $0x60] sm:$0xff]
                %181 = vst [vmem:[%s155 + $0x60] sm:$0xff] %v180
                %v182 = vld [vmem:[%s154 + $0x68] sm:$0xff]
                %183 = vst [vmem:[%s155 + $0x68] sm:$0xff] %v182
                %v184 = vld [vmem:[%s154 + $0x70] sm:$0xff]
                %185 = vst [vmem:[%s155 + $0x70] sm:$0xff] %v184
                %v186 = vld [vmem:[%s154 + $0x78] sm:$0xff]
                %187 = vst [vmem:[%s155 + $0x78] sm:$0xff] %v186
                %v188 = vld [vmem:[%s154 + $0x80] sm:$0xff]
                %189 = vst [vmem:[%s155 + $0x80] sm:$0xff] %v188
                %v190 = vld [vmem:[%s154 + $0x88] sm:$0xff]
                %191 = vst [vmem:[%s155 + $0x88] sm:$0xff] %v190
                %v192 = vld [vmem:[%s154 + $0x90] sm:$0xff]
                %193 = vst [vmem:[%s155 + $0x90] sm:$0xff] %v192
                %v194 = vld [vmem:[%s154 + $0x98] sm:$0xff]
                %195 = vst [vmem:[%s155 + $0x98] sm:$0xff] %v194
                %v196 = vld [vmem:[%s154 + $0xa0] sm:$0xff]
                %197 = vst [vmem:[%s155 + $0xa0] sm:$0xff] %v196
                %v198 = vld [vmem:[%s154 + $0xa8] sm:$0xff]
                %199 = vst [vmem:[%s155 + $0xa8] sm:$0xff] %v198
                %v200 = vld [vmem:[%s154 + $0xb0] sm:$0xff]
                %201 = vst [vmem:[%s155 + $0xb0] sm:$0xff] %v200
                %v202 = vld [vmem:[%s154 + $0xb8] sm:$0xff]
                %203 = vst [vmem:[%s155 + $0xb8] sm:$0xff] %v202
                %v204 = vld [vmem:[%s154 + $0xc0] sm:$0xff]
                %205 = vst [vmem:[%s155 + $0xc0] sm:$0xff] %v204
                %v206 = vld [vmem:[%s154 + $0xc8] sm:$0xff]
                %207 = vst [vmem:[%s155 + $0xc8] sm:$0xff] %v206
                %v208 = vld [vmem:[%s154 + $0xd0] sm:$0xff]
                %209 = vst [vmem:[%s155 + $0xd0] sm:$0xff] %v208
                %v210 = vld [vmem:[%s154 + $0xd8] sm:$0xff]
                %211 = vst [vmem:[%s155 + $0xd8] sm:$0xff] %v210
                %v212 = vld [vmem:[%s154 + $0xe0] sm:$0xff]
                %213 = vst [vmem:[%s155 + $0xe0] sm:$0xff] %v212
                %v214 = vld [vmem:[%s154 + $0xe8] sm:$0xff]
                %215 = vst [vmem:[%s155 + $0xe8] sm:$0xff] %v214
                %v216 = vld [vmem:[%s154 + $0xf0] sm:$0xff]
                %217 = vst [vmem:[%s155 + $0xf0] sm:$0xff] %v216
                %v218 = vld [vmem:[%s154 + $0xf8] sm:$0xff]
                %219 = vst [vmem:[%s155 + $0xf8] sm:$0xff] %v218
                %v220 = vld [vmem:[%s154 + $0x200] sm:$0xff]
                %221 = vst [vmem:[%s155 + $0x100] sm:$0xff] %v220
                %v222 = vld [vmem:[%s154 + $0x208] sm:$0xff]
                %223 = vst [vmem:[%s155 + $0x108] sm:$0xff] %v222
                %v224 = vld [vmem:[%s154 + $0x210] sm:$0xff]
                %225 = vst [vmem:[%s155 + $0x110] sm:$0xff] %v224
                %v226 = vld [vmem:[%s154 + $0x218] sm:$0xff]
                %227 = vst [vmem:[%s155 + $0x118] sm:$0xff] %v226
                %v228 = vld [vmem:[%s154 + $0x220] sm:$0xff]
                %229 = vst [vmem:[%s155 + $0x120] sm:$0xff] %v228
                %v230 = vld [vmem:[%s154 + $0x228] sm:$0xff]
                %231 = vst [vmem:[%s155 + $0x128] sm:$0xff] %v230
                %v232 = vld [vmem:[%s154 + $0x230] sm:$0xff]
                %233 = vst [vmem:[%s155 + $0x130] sm:$0xff] %v232
                %v234 = vld [vmem:[%s154 + $0x238] sm:$0xff]
                %235 = vst [vmem:[%s155 + $0x138] sm:$0xff] %v234
                %v236 = vld [vmem:[%s154 + $0x240] sm:$0xff]
                %237 = vst [vmem:[%s155 + $0x140] sm:$0xff] %v236
                %v238 = vld [vmem:[%s154 + $0x248] sm:$0xff]
                %239 = vst [vmem:[%s155 + $0x148] sm:$0xff] %v238
                %v240 = vld [vmem:[%s154 + $0x250] sm:$0xff]
                %241 = vst [vmem:[%s155 + $0x150] sm:$0xff] %v240
                %v242 = vld [vmem:[%s154 + $0x258] sm:$0xff]
                %243 = vst [vmem:[%s155 + $0x158] sm:$0xff] %v242
                %v244 = vld [vmem:[%s154 + $0x260] sm:$0xff]
                %245 = vst [vmem:[%s155 + $0x160] sm:$0xff] %v244
                %v246 = vld [vmem:[%s154 + $0x268] sm:$0xff]
                %247 = vst [vmem:[%s155 + $0x168] sm:$0xff] %v246
                %v248 = vld [vmem:[%s154 + $0x270] sm:$0xff]
                %249 = vst [vmem:[%s155 + $0x170] sm:$0xff] %v248
                %v250 = vld [vmem:[%s154 + $0x278] sm:$0xff]
                %251 = vst [vmem:[%s155 + $0x178] sm:$0xff] %v250
                %v252 = vld [vmem:[%s154 + $0x280] sm:$0xff]
                %253 = vst [vmem:[%s155 + $0x180] sm:$0xff] %v252
                %v254 = vld [vmem:[%s154 + $0x288] sm:$0xff]
                %255 = vst [vmem:[%s155 + $0x188] sm:$0xff] %v254
                %v256 = vld [vmem:[%s154 + $0x290] sm:$0xff]
                %257 = vst [vmem:[%s155 + $0x190] sm:$0xff] %v256
                %v258 = vld [vmem:[%s154 + $0x298] sm:$0xff]
                %259 = vst [vmem:[%s155 + $0x198] sm:$0xff] %v258
                %v260 = vld [vmem:[%s154 + $0x2a0] sm:$0xff]
                %261 = vst [vmem:[%s155 + $0x1a0] sm:$0xff] %v260
                %v262 = vld [vmem:[%s154 + $0x2a8] sm:$0xff]
                %263 = vst [vmem:[%s155 + $0x1a8] sm:$0xff] %v262
                %v264 = vld [vmem:[%s154 + $0x2b0] sm:$0xff]
                %265 = vst [vmem:[%s155 + $0x1b0] sm:$0xff] %v264
                %v266 = vld [vmem:[%s154 + $0x2b8] sm:$0xff]
                %267 = vst [vmem:[%s155 + $0x1b8] sm:$0xff] %v266
                %v268 = vld [vmem:[%s154 + $0x2c0] sm:$0xff]
                %269 = vst [vmem:[%s155 + $0x1c0] sm:$0xff] %v268
                %v270 = vld [vmem:[%s154 + $0x2c8] sm:$0xff]
                %271 = vst [vmem:[%s155 + $0x1c8] sm:$0xff] %v270
                %v272 = vld [vmem:[%s154 + $0x2d0] sm:$0xff]
                %273 = vst [vmem:[%s155 + $0x1d0] sm:$0xff] %v272
                %v274 = vld [vmem:[%s154 + $0x2d8] sm:$0xff]
                %275 = vst [vmem:[%s155 + $0x1d8] sm:$0xff] %v274
                %v276 = vld [vmem:[%s154 + $0x2e0] sm:$0xff]
                %277 = vst [vmem:[%s155 + $0x1e0] sm:$0xff] %v276
                %v278 = vld [vmem:[%s154 + $0x2e8] sm:$0xff]
                %279 = vst [vmem:[%s155 + $0x1e8] sm:$0xff] %v278
                %v280 = vld [vmem:[%s154 + $0x2f0] sm:$0xff]
                %281 = vst [vmem:[%s155 + $0x1f0] sm:$0xff] %v280
                %v282 = vld [vmem:[%s154 + $0x2f8] sm:$0xff]
                %283 = vst [vmem:[%s155 + $0x1f8] sm:$0xff] %v282
                %v284 = vld [vmem:[%s154 + $0x400] sm:$0xff]
                %285 = vst [vmem:[%s155 + $0x200] sm:$0xff] %v284
                %v286 = vld [vmem:[%s154 + $0x408] sm:$0xff]
                %287 = vst [vmem:[%s155 + $0x208] sm:$0xff] %v286
                %v288 = vld [vmem:[%s154 + $0x410] sm:$0xff]
                %289 = vst [vmem:[%s155 + $0x210] sm:$0xff] %v288
                %v290 = vld [vmem:[%s154 + $0x418] sm:$0xff]
                %291 = vst [vmem:[%s155 + $0x218] sm:$0xff] %v290
                %v292 = vld [vmem:[%s154 + $0x420] sm:$0xff]
                %293 = vst [vmem:[%s155 + $0x220] sm:$0xff] %v292
                %v294 = vld [vmem:[%s154 + $0x428] sm:$0xff]
                %295 = vst [vmem:[%s155 + $0x228] sm:$0xff] %v294
                %v296 = vld [vmem:[%s154 + $0x430] sm:$0xff]
                %297 = vst [vmem:[%s155 + $0x230] sm:$0xff] %v296
                %v298 = vld [vmem:[%s154 + $0x438] sm:$0xff]
                %299 = vst [vmem:[%s155 + $0x238] sm:$0xff] %v298
                %v300 = vld [vmem:[%s154 + $0x440] sm:$0xff]
                %301 = vst [vmem:[%s155 + $0x240] sm:$0xff] %v300
                %v302 = vld [vmem:[%s154 + $0x448] sm:$0xff]
                %303 = vst [vmem:[%s155 + $0x248] sm:$0xff] %v302
                %v304 = vld [vmem:[%s154 + $0x450] sm:$0xff]
                %305 = vst [vmem:[%s155 + $0x250] sm:$0xff] %v304
                %v306 = vld [vmem:[%s154 + $0x458] sm:$0xff]
                %307 = vst [vmem:[%s155 + $0x258] sm:$0xff] %v306
                %v308 = vld [vmem:[%s154 + $0x460] sm:$0xff]
                %309 = vst [vmem:[%s155 + $0x260] sm:$0xff] %v308
                %v310 = vld [vmem:[%s154 + $0x468] sm:$0xff]
                %311 = vst [vmem:[%s155 + $0x268] sm:$0xff] %v310
                %v312 = vld [vmem:[%s154 + $0x470] sm:$0xff]
                %313 = vst [vmem:[%s155 + $0x270] sm:$0xff] %v312
                %v314 = vld [vmem:[%s154 + $0x478] sm:$0xff]
                %315 = vst [vmem:[%s155 + $0x278] sm:$0xff] %v314
                %v316 = vld [vmem:[%s154 + $0x480] sm:$0xff]
                %317 = vst [vmem:[%s155 + $0x280] sm:$0xff] %v316
                %v318 = vld [vmem:[%s154 + $0x488] sm:$0xff]
                %319 = vst [vmem:[%s155 + $0x288] sm:$0xff] %v318
                %v320 = vld [vmem:[%s154 + $0x490] sm:$0xff]
                %321 = vst [vmem:[%s155 + $0x290] sm:$0xff] %v320
                %v322 = vld [vmem:[%s154 + $0x498] sm:$0xff]
                %323 = vst [vmem:[%s155 + $0x298] sm:$0xff] %v322
                %v324 = vld [vmem:[%s154 + $0x4a0] sm:$0xff]
                %325 = vst [vmem:[%s155 + $0x2a0] sm:$0xff] %v324
                %v326 = vld [vmem:[%s154 + $0x4a8] sm:$0xff]
                %327 = vst [vmem:[%s155 + $0x2a8] sm:$0xff] %v326
                %v328 = vld [vmem:[%s154 + $0x4b0] sm:$0xff]
                %329 = vst [vmem:[%s155 + $0x2b0] sm:$0xff] %v328
                %v330 = vld [vmem:[%s154 + $0x4b8] sm:$0xff]
                %331 = vst [vmem:[%s155 + $0x2b8] sm:$0xff] %v330
                %v332 = vld [vmem:[%s154 + $0x4c0] sm:$0xff]
                %333 = vst [vmem:[%s155 + $0x2c0] sm:$0xff] %v332
                %v334 = vld [vmem:[%s154 + $0x4c8] sm:$0xff]
                %335 = vst [vmem:[%s155 + $0x2c8] sm:$0xff] %v334
                %v336 = vld [vmem:[%s154 + $0x4d0] sm:$0xff]
                %337 = vst [vmem:[%s155 + $0x2d0] sm:$0xff] %v336
                %v338 = vld [vmem:[%s154 + $0x4d8] sm:$0xff]
                %339 = vst [vmem:[%s155 + $0x2d8] sm:$0xff] %v338
                %v340 = vld [vmem:[%s154 + $0x4e0] sm:$0xff]
                %341 = vst [vmem:[%s155 + $0x2e0] sm:$0xff] %v340
                %v342 = vld [vmem:[%s154 + $0x4e8] sm:$0xff]
                %343 = vst [vmem:[%s155 + $0x2e8] sm:$0xff] %v342
                %v344 = vld [vmem:[%s154 + $0x4f0] sm:$0xff]
                %345 = vst [vmem:[%s155 + $0x2f0] sm:$0xff] %v344
                %v346 = vld [vmem:[%s154 + $0x4f8] sm:$0xff]
                %347 = vst [vmem:[%s155 + $0x2f8] sm:$0xff] %v346
              $region41: #{_forward_impl.1} parent=35 // loop_footer
                %s153 = sadd.s32 1, %s149
              $region42: #{_forward_impl.1} parent=35 // loop_footer_branch
                %148 = sbr.rel target = $region38
              $region43: #{_forward_impl.1} parent=35 // loop_exit
                _
            $region36: #{_forward_impl.1} parent=27 // pred_fallthru
              _
          $region28: #{_forward_impl.1} parent=23 // pred_fallthru
            _
          %552 = vnop
        $region24: #{_forward_impl.1} parent=19 // pred_fallthru
          _
        // Predicated region
        $region59: #{_forward_impl.1} parent=19 // pred_check
          %p553 = pneg %p76
        $region60: #{_forward_impl.1} parent=19 // pred_check_branch
          %555 = sbr.rel (%p553) target = $region62
        $region61: #{_forward_impl.1} parent=19 // pred_region
          %s556 = smul.u32 32, %s9
          %p557 = scmp.lt.s32.totalorder %s556, 63
          %s558 = scalar_select %p557, %s556, 63
          %s559 = smul.addr %s558, 8
          %s560 = scalar_lea.vmem %s2, %s559
          %s561 = smul.u32 32, %s9
        $region62: #{_forward_impl.1} parent=19 // pred_fallthru
          _
      $region20: #{_forward_impl.1} parent=5 // pred_fallthru
        _
      %p562 = scmp.le.s32.totalorder 1, %s9
      %p563 = scmp.lt.s32.totalorder %s9, 3
      %p564 = pnand %p562, %p563
      %p565 = pneg %p564
      // Predicated region
      $region63: #{_forward_impl.1} parent=5 // pred_check
        _
      $region64: #{_forward_impl.1} parent=5 // pred_check_branch
        %567 = sbr.rel (%p564) target = $region66
      $region65: #{_forward_impl.1} parent=5 // pred_region
        %s568 = ssub.s32 %s9, 1
        %s569 = sand.u32 %s43, 1
        %s570 = sand.u32 %s43, 1
        %s571 = smul.addr %s570, 768
        %s572 = scalar_lea.vmem [#allocation2], %s571
        // Predicated region
        $region67: #{_forward_impl.1} parent=65 // pred_check
          %p573 = pneg %p56
        $region68: #{_forward_impl.1} parent=65 // pred_check_branch
          %575 = sbr.rel (%p573) target = $region70
        $region69: #{_forward_impl.1} parent=65 // pred_region
          _
        $region70: #{_forward_impl.1} parent=65 // pred_fallthru
          _
        %p576 = pneg %p30
        %p577 = pneg %p27
        %s578 = sand.u32 %s43, 1
        %s579 = sand.u32 %s43, 1
        %s580 = smul.addr %s579, 768
        %s581 = scalar_lea.vmem [#allocation2], %s580
        %p582 = pneg %p56
        %p583 = pneg %p53
        %s584 = smul.u32 32, %s14
        %p585 = scmp.lt.s32.totalorder %s584, 63
        %s586 = scalar_select %p585, %s584, 63
        %s587 = smul.addr %s586, 8
        %s588 = scalar_lea.vmem %s2, %s587
        %p589 = pneg %p82
        %p590 = pneg %p79
        %p591 = pneg %p108
        %p592 = pneg %p105
        %s593 = smul.u32 32, %s14
        %p594 = scmp.lt.s32.totalorder %s593, 63
        %s595 = scalar_select %p594, %s593, 63
        %s596 = smul.addr %s595, 8
        %s597 = scalar_lea.vmem %s3, %s596
        %s598 = smul.u32 32, %s14
        %s599 = smul.u32 32, %s14
        %p600 = scmp.lt.s32.totalorder %s599, 63
        %s601 = scalar_select %p600, %s599, 63
        %s602 = smul.addr %s601, 8
        %s603 = scalar_lea.vmem %s2, %s602
        %s604 = smul.u32 32, %s14
        %s605 = smul.u32 32, %s14
        %p606 = scmp.lt.s32.totalorder %s605, 63
        %s607 = scalar_select %p606, %s605, 63
        %s608 = smul.addr %s607, 8
        %s609 = scalar_lea.vmem %s3, %s608
        %s610 = smul.u32 32, %s14
        %v612 = vld [vmem:[%s0] sm:$0xff]
        %v613 = vld [vmem:[%s0 + $0x8] sm:$0xff]
        %v614 = vld [vmem:[%s0 + $0x10] sm:$0xff]
        %v615 = vld [vmem:[%s0 + $0x18] sm:$0xff]
        %v616 = vld [vmem:[%s0 + $0x20] sm:$0xff]
        %v617 = vld [vmem:[%s0 + $0x28] sm:$0xff]
        %v618 = vld [vmem:[%s0 + $0x30] sm:$0xff]
        %v619 = vld [vmem:[%s0 + $0x38] sm:$0xff]
        %v620 = vld [vmem:[%s0 + $0x40] sm:$0xff]
        %v621 = vld [vmem:[%s0 + $0x48] sm:$0xff]
        %v622 = vld [vmem:[%s0 + $0x50] sm:$0xff]
        %v623 = vld [vmem:[%s0 + $0x58] sm:$0xff]
        %v624 = vld [vmem:[%s0 + $0x60] sm:$0xff]
        %v625 = vld [vmem:[%s0 + $0x68] sm:$0xff]
        %v626 = vld [vmem:[%s0 + $0x70] sm:$0xff]
        %v627 = vld [vmem:[%s0 + $0x78] sm:$0xff]
        %v628 = vld [vmem:[%s0 + $0x80] sm:$0xff]
        %v629 = vld [vmem:[%s0 + $0x88] sm:$0xff]
        %v630 = vld [vmem:[%s0 + $0x90] sm:$0xff]
        %v631 = vld [vmem:[%s0 + $0x98] sm:$0xff]
        %v632 = vld [vmem:[%s0 + $0xa0] sm:$0xff]
        %v633 = vld [vmem:[%s0 + $0xa8] sm:$0xff]
        %v634 = vld [vmem:[%s0 + $0xb0] sm:$0xff]
        %v635 = vld [vmem:[%s0 + $0xb8] sm:$0xff]
        %v636 = vld [vmem:[%s0 + $0xc0] sm:$0xff]
        %v637 = vld [vmem:[%s0 + $0xc8] sm:$0xff]
        %v638 = vld [vmem:[%s0 + $0xd0] sm:$0xff]
        %v639 = vld [vmem:[%s0 + $0xd8] sm:$0xff]
        %v640 = vld [vmem:[%s0 + $0xe0] sm:$0xff]
        %v641 = vld [vmem:[%s0 + $0xe8] sm:$0xff]
        %v642 = vld [vmem:[%s0 + $0xf0] sm:$0xff]
        %v643 = vld [vmem:[%s0 + $0xf8] sm:$0xff]
        %v644 = vlaneseq
        %v645 = vand.u32 %v644, 127
        %vm646 = vcmp.lt.s32.totalorder %v645, 49
        %vm647 = vcmp.lt.s32.totalorder %v645, 0
        %v648 = vsub.s32 0, %v645
        %v649 = vsel %vm647, %v648, %v645
        %v650 = vmul.u32.u64.compose %v649, 2454267026
        %v651 = vextract.low.u32 %v650
        %v652 = vextract.high.u32 %v650
        %vm653 = vc.u32 %v651, 2454267026
        %v654 = vsel %vm653, 1, 0
        %v655 = vadd.s32 %v652, %v654
        %v656 = vshrl.u32 %v655, 2
        %v657 = vmul.u32 %v656, 7
        %v658 = vsub.s32 %v649, %v657
        %v659 = vsub.s32 0, %v658
        %v660 = vsel %vm647, %v659, %v658
        %vm661 = vcmp.ne.s32.totalorder %v660, 0
        %vm662 = vcmp.lt.s32.totalorder %v660, 0
        %vm663 = vmand %vm662, %vm661
        %v664 = vadd.s32 %v660, 7
        %v665 = vsel %vm663, %v664, %v660
        %vm666 = vcmp.ne.s32.totalorder %v665, 0
        %vm667 = vmand %vm666, %vm646
        %668 = vrot.lane.b32.xlu0 %v612, 1
        %v669 = vpop.permute.xlu0 %668
        %670 = vrot.lane.b32.xlu0 %v613, 1
        %v671 = vpop.permute.xlu0 %670
        %672 = vrot.lane.b32.xlu0 %v614, 1
        %v673 = vpop.permute.xlu0 %672
        %674 = vrot.lane.b32.xlu0 %v615, 1
        %v675 = vpop.permute.xlu0 %674
        %676 = vrot.lane.b32.xlu0 %v616, 1
        %v677 = vpop.permute.xlu0 %676
        %678 = vrot.lane.b32.xlu0 %v617, 1
        %v679 = vpop.permute.xlu0 %678
        %680 = vrot.lane.b32.xlu0 %v618, 1
        %v681 = vpop.permute.xlu0 %680
        %682 = vrot.lane.b32.xlu0 %v619, 1
        %v683 = vpop.permute.xlu0 %682
        %684 = vrot.lane.b32.xlu0 %v620, 1
        %v685 = vpop.permute.xlu0 %684
        %686 = vrot.lane.b32.xlu0 %v621, 1
        %v687 = vpop.permute.xlu0 %686
        %688 = vrot.lane.b32.xlu0 %v622, 1
        %v689 = vpop.permute.xlu0 %688
        %690 = vrot.lane.b32.xlu0 %v623, 1
        %v691 = vpop.permute.xlu0 %690
        %692 = vrot.lane.b32.xlu0 %v624, 1
        %v693 = vpop.permute.xlu0 %692
        %694 = vrot.lane.b32.xlu0 %v625, 1
        %v695 = vpop.permute.xlu0 %694
        %696 = vrot.lane.b32.xlu0 %v626, 1
        %v697 = vpop.permute.xlu0 %696
        %698 = vrot.lane.b32.xlu0 %v627, 1
        %v699 = vpop.permute.xlu0 %698
        %700 = vrot.lane.b32.xlu0 %v628, 1
        %v701 = vpop.permute.xlu0 %700
        %702 = vrot.lane.b32.xlu0 %v629, 1
        %v703 = vpop.permute.xlu0 %702
        %704 = vrot.lane.b32.xlu0 %v630, 1
        %v705 = vpop.permute.xlu0 %704
        %706 = vrot.lane.b32.xlu0 %v631, 1
        %v707 = vpop.permute.xlu0 %706
        %708 = vrot.lane.b32.xlu0 %v632, 1
        %v709 = vpop.permute.xlu0 %708
        %710 = vrot.lane.b32.xlu0 %v633, 1
        %v711 = vpop.permute.xlu0 %710
        %712 = vrot.lane.b32.xlu0 %v634, 1
        %v713 = vpop.permute.xlu0 %712
        %714 = vrot.lane.b32.xlu0 %v635, 1
        %v715 = vpop.permute.xlu0 %714
        %716 = vrot.lane.b32.xlu0 %v636, 1
        %v717 = vpop.permute.xlu0 %716
        %718 = vrot.lane.b32.xlu0 %v637, 1
        %v719 = vpop.permute.xlu0 %718
        %720 = vrot.lane.b32.xlu0 %v638, 1
        %v721 = vpop.permute.xlu0 %720
        %722 = vrot.lane.b32.xlu0 %v639, 1
        %v723 = vpop.permute.xlu0 %722
        %724 = vrot.lane.b32.xlu0 %v640, 1
        %v725 = vpop.permute.xlu0 %724
        %726 = vrot.lane.b32.xlu0 %v641, 1
        %v727 = vpop.permute.xlu0 %726
        %728 = vrot.lane.b32.xlu0 %v642, 1
        %v729 = vpop.permute.xlu0 %728
        %730 = vrot.lane.b32.xlu0 %v643, 1
        %v731 = vpop.permute.xlu0 %730
        %v732 = vsel %vm667, %v669, 0.0
        %v733 = vsel %vm667, %v671, 0.0
        %v734 = vsel %vm667, %v673, 0.0
        %v735 = vsel %vm667, %v675, 0.0
        %v736 = vsel %vm667, %v677, 0.0
        %v737 = vsel %vm667, %v679, 0.0
        %v738 = vsel %vm667, %v681, 0.0
        %v739 = vsel %vm667, %v683, 0.0
        %v740 = vsel %vm667, %v685, 0.0
        %v741 = vsel %vm667, %v687, 0.0
        %v742 = vsel %vm667, %v689, 0.0
        %v743 = vsel %vm667, %v691, 0.0
        %v744 = vsel %vm667, %v693, 0.0
        %v745 = vsel %vm667, %v695, 0.0
        %v746 = vsel %vm667, %v697, 0.0
        %v747 = vsel %vm667, %v699, 0.0
        %v748 = vsel %vm667, %v701, 0.0
        %v749 = vsel %vm667, %v703, 0.0
        %v750 = vsel %vm667, %v705, 0.0
        %v751 = vsel %vm667, %v707, 0.0
        %v752 = vsel %vm667, %v709, 0.0
        %v753 = vsel %vm667, %v711, 0.0
        %v754 = vsel %vm667, %v713, 0.0
        %v755 = vsel %vm667, %v715, 0.0
        %v756 = vsel %vm667, %v717, 0.0
        %v757 = vsel %vm667, %v719, 0.0
        %v758 = vsel %vm667, %v721, 0.0
        %v759 = vsel %vm667, %v723, 0.0
        %v760 = vsel %vm667, %v725, 0.0
        %v761 = vsel %vm667, %v727, 0.0
        %v762 = vsel %vm667, %v729, 0.0
        %v763 = vsel %vm667, %v731, 0.0
        %vm764 = vcmp.ne.s32.totalorder %v665, 6
        %vm765 = vmand %vm764, %vm646
        %766 = vrot.lane.b32.xlu0 %v612, 127
        %v767 = vpop.permute.xlu0 %766
        %768 = vrot.lane.b32.xlu0 %v613, 127
        %v769 = vpop.permute.xlu0 %768
        %770 = vrot.lane.b32.xlu0 %v614, 127
        %v771 = vpop.permute.xlu0 %770
        %772 = vrot.lane.b32.xlu0 %v615, 127
        %v773 = vpop.permute.xlu0 %772
        %774 = vrot.lane.b32.xlu0 %v616, 127
        %v775 = vpop.permute.xlu0 %774
        %776 = vrot.lane.b32.xlu0 %v617, 127
        %v777 = vpop.permute.xlu0 %776
        %778 = vrot.lane.b32.xlu0 %v618, 127
        %v779 = vpop.permute.xlu0 %778
        %780 = vrot.lane.b32.xlu0 %v619, 127
        %v781 = vpop.permute.xlu0 %780
        %782 = vrot.lane.b32.xlu0 %v620, 127
        %v783 = vpop.permute.xlu0 %782
        %784 = vrot.lane.b32.xlu0 %v621, 127
        %v785 = vpop.permute.xlu0 %784
        %786 = vrot.lane.b32.xlu0 %v622, 127
        %v787 = vpop.permute.xlu0 %786
        %788 = vrot.lane.b32.xlu0 %v623, 127
        %v789 = vpop.permute.xlu0 %788
        %790 = vrot.lane.b32.xlu0 %v624, 127
        %v791 = vpop.permute.xlu0 %790
        %792 = vrot.lane.b32.xlu0 %v625, 127
        %v793 = vpop.permute.xlu0 %792
        %794 = vrot.lane.b32.xlu0 %v626, 127
        %v795 = vpop.permute.xlu0 %794
        %796 = vrot.lane.b32.xlu0 %v627, 127
        %v797 = vpop.permute.xlu0 %796
        %798 = vrot.lane.b32.xlu0 %v628, 127
        %v799 = vpop.permute.xlu0 %798
        %800 = vrot.lane.b32.xlu0 %v629, 127
        %v801 = vpop.permute.xlu0 %800
        %802 = vrot.lane.b32.xlu0 %v630, 127
        %v803 = vpop.permute.xlu0 %802
        %804 = vrot.lane.b32.xlu0 %v631, 127
        %v805 = vpop.permute.xlu0 %804
        %806 = vrot.lane.b32.xlu0 %v632, 127
        %v807 = vpop.permute.xlu0 %806
        %808 = vrot.lane.b32.xlu0 %v633, 127
        %v809 = vpop.permute.xlu0 %808
        %810 = vrot.lane.b32.xlu0 %v634, 127
        %v811 = vpop.permute.xlu0 %810
        %812 = vrot.lane.b32.xlu0 %v635, 127
        %v813 = vpop.permute.xlu0 %812
        %814 = vrot.lane.b32.xlu0 %v636, 127
        %v815 = vpop.permute.xlu0 %814
        %816 = vrot.lane.b32.xlu0 %v637, 127
        %v817 = vpop.permute.xlu0 %816
        %818 = vrot.lane.b32.xlu0 %v638, 127
        %v819 = vpop.permute.xlu0 %818
        %820 = vrot.lane.b32.xlu0 %v639, 127
        %v821 = vpop.permute.xlu0 %820
        %822 = vrot.lane.b32.xlu0 %v640, 127
        %v823 = vpop.permute.xlu0 %822
        %824 = vrot.lane.b32.xlu0 %v641, 127
        %v825 = vpop.permute.xlu0 %824
        %826 = vrot.lane.b32.xlu0 %v642, 127
        %v827 = vpop.permute.xlu0 %826
        %828 = vrot.lane.b32.xlu0 %v643, 127
        %v829 = vpop.permute.xlu0 %828
        %v830 = vsel %vm765, %v767, 0.0
        %v831 = vsel %vm765, %v769, 0.0
        %v832 = vsel %vm765, %v771, 0.0
        %v833 = vsel %vm765, %v773, 0.0
        %v834 = vsel %vm765, %v775, 0.0
        %v835 = vsel %vm765, %v777, 0.0
        %v836 = vsel %vm765, %v779, 0.0
        %v837 = vsel %vm765, %v781, 0.0
        %v838 = vsel %vm765, %v783, 0.0
        %v839 = vsel %vm765, %v785, 0.0
        %v840 = vsel %vm765, %v787, 0.0
        %v841 = vsel %vm765, %v789, 0.0
        %v842 = vsel %vm765, %v791, 0.0
        %v843 = vsel %vm765, %v793, 0.0
        %v844 = vsel %vm765, %v795, 0.0
        %v845 = vsel %vm765, %v797, 0.0
        %v846 = vsel %vm765, %v799, 0.0
        %v847 = vsel %vm765, %v801, 0.0
        %v848 = vsel %vm765, %v803, 0.0
        %v849 = vsel %vm765, %v805, 0.0
        %v850 = vsel %vm765, %v807, 0.0
        %v851 = vsel %vm765, %v809, 0.0
        %v852 = vsel %vm765, %v811, 0.0
        %v853 = vsel %vm765, %v813, 0.0
        %v854 = vsel %vm765, %v815, 0.0
        %v855 = vsel %vm765, %v817, 0.0
        %v856 = vsel %vm765, %v819, 0.0
        %v857 = vsel %vm765, %v821, 0.0
        %v858 = vsel %vm765, %v823, 0.0
        %v859 = vsel %vm765, %v825, 0.0
        %v860 = vsel %vm765, %v827, 0.0
        %v861 = vsel %vm765, %v829, 0.0
        %v862 = vld [vmem:[%s572] sm:$0xff]
        %v863 = vld [vmem:[%s572 + $0x8] sm:$0xff]
        %v864 = vld [vmem:[%s572 + $0x10] sm:$0xff]
        %v865 = vld [vmem:[%s572 + $0x18] sm:$0xff]
        %v866 = vld [vmem:[%s572 + $0x20] sm:$0xff]
        %v867 = vld [vmem:[%s572 + $0x28] sm:$0xff]
        %v868 = vld [vmem:[%s572 + $0x30] sm:$0xff]
        %v869 = vld [vmem:[%s572 + $0x38] sm:$0xff]
        %v870 = vld [vmem:[%s572 + $0x40] sm:$0xff]
        %v871 = vld [vmem:[%s572 + $0x48] sm:$0xff]
        %v872 = vld [vmem:[%s572 + $0x50] sm:$0xff]
        %v873 = vld [vmem:[%s572 + $0x58] sm:$0xff]
        %v874 = vld [vmem:[%s572 + $0x60] sm:$0xff]
        %v875 = vld [vmem:[%s572 + $0x68] sm:$0xff]
        %v876 = vld [vmem:[%s572 + $0x70] sm:$0xff]
        %v877 = vld [vmem:[%s572 + $0x78] sm:$0xff]
        %v878 = vld [vmem:[%s572 + $0x80] sm:$0xff]
        %v879 = vld [vmem:[%s572 + $0x88] sm:$0xff]
        %v880 = vld [vmem:[%s572 + $0x90] sm:$0xff]
        %v881 = vld [vmem:[%s572 + $0x98] sm:$0xff]
        %v882 = vld [vmem:[%s572 + $0xa0] sm:$0xff]
        %v883 = vld [vmem:[%s572 + $0xa8] sm:$0xff]
        %v884 = vld [vmem:[%s572 + $0xb0] sm:$0xff]
        %v885 = vld [vmem:[%s572 + $0xb8] sm:$0xff]
        %v886 = vld [vmem:[%s572 + $0xc0] sm:$0xff]
        %v887 = vld [vmem:[%s572 + $0xc8] sm:$0xff]
        %v888 = vld [vmem:[%s572 + $0xd0] sm:$0xff]
        %v889 = vld [vmem:[%s572 + $0xd8] sm:$0xff]
        %v890 = vld [vmem:[%s572 + $0xe0] sm:$0xff]
        %v891 = vld [vmem:[%s572 + $0xe8] sm:$0xff]
        %v892 = vld [vmem:[%s572 + $0xf0] sm:$0xff]
        %v893 = vld [vmem:[%s572 + $0xf8] sm:$0xff]
        %v894 = vpack.c.bf16 %v733, %v732
        %v895 = vpack.c.bf16 %v735, %v734
        %v896 = vpack.c.bf16 %v737, %v736
        %v897 = vpack.c.bf16 %v739, %v738
        %v898 = vpack.c.bf16 %v741, %v740
        %v899 = vpack.c.bf16 %v743, %v742
        %v900 = vpack.c.bf16 %v745, %v744
        %v901 = vpack.c.bf16 %v747, %v746
        %v902 = vpack.c.bf16 %v749, %v748
        %v903 = vpack.c.bf16 %v751, %v750
        %v904 = vpack.c.bf16 %v753, %v752
        %v905 = vpack.c.bf16 %v755, %v754
        %v906 = vpack.c.bf16 %v757, %v756
        %v907 = vpack.c.bf16 %v759, %v758
        %v908 = vpack.c.bf16 %v761, %v760
        %v909 = vpack.c.bf16 %v763, %v762
        %s910 = scalar_lea.vmem %s572, 256 [#allocation2]
        %v911 = vld [vmem:[%s910] sm:$0xff]
        %v912 = vld [vmem:[%s910 + $0x8] sm:$0xff]
        %v913 = vld [vmem:[%s910 + $0x10] sm:$0xff]
        %v914 = vld [vmem:[%s910 + $0x18] sm:$0xff]
        %v915 = vld [vmem:[%s910 + $0x20] sm:$0xff]
        %v916 = vld [vmem:[%s910 + $0x28] sm:$0xff]
        %v917 = vld [vmem:[%s910 + $0x30] sm:$0xff]
        %v918 = vld [vmem:[%s910 + $0x38] sm:$0xff]
        %v919 = vld [vmem:[%s910 + $0x40] sm:$0xff]
        %v920 = vld [vmem:[%s910 + $0x48] sm:$0xff]
        %v921 = vld [vmem:[%s910 + $0x50] sm:$0xff]
        %v922 = vld [vmem:[%s910 + $0x58] sm:$0xff]
        %v923 = vld [vmem:[%s910 + $0x60] sm:$0xff]
        %v924 = vld [vmem:[%s910 + $0x68] sm:$0xff]
        %v925 = vld [vmem:[%s910 + $0x70] sm:$0xff]
        %v926 = vld [vmem:[%s910 + $0x78] sm:$0xff]
        %v927 = vld [vmem:[%s910 + $0x80] sm:$0xff]
        %v928 = vld [vmem:[%s910 + $0x88] sm:$0xff]
        %v929 = vld [vmem:[%s910 + $0x90] sm:$0xff]
        %v930 = vld [vmem:[%s910 + $0x98] sm:$0xff]
        %v931 = vld [vmem:[%s910 + $0xa0] sm:$0xff]
        %v932 = vld [vmem:[%s910 + $0xa8] sm:$0xff]
        %v933 = vld [vmem:[%s910 + $0xb0] sm:$0xff]
        %v934 = vld [vmem:[%s910 + $0xb8] sm:$0xff]
        %v935 = vld [vmem:[%s910 + $0xc0] sm:$0xff]
        %v936 = vld [vmem:[%s910 + $0xc8] sm:$0xff]
        %v937 = vld [vmem:[%s910 + $0xd0] sm:$0xff]
        %v938 = vld [vmem:[%s910 + $0xd8] sm:$0xff]
        %v939 = vld [vmem:[%s910 + $0xe0] sm:$0xff]
        %v940 = vld [vmem:[%s910 + $0xe8] sm:$0xff]
        %v941 = vld [vmem:[%s910 + $0xf0] sm:$0xff]
        %v942 = vld [vmem:[%s910 + $0xf8] sm:$0xff]
        %v943 = vpack.c.bf16 %v613, %v612
        %v944 = vpack.c.bf16 %v615, %v614
        %v945 = vpack.c.bf16 %v617, %v616
        %v946 = vpack.c.bf16 %v619, %v618
        %v947 = vpack.c.bf16 %v621, %v620
        %v948 = vpack.c.bf16 %v623, %v622
        %v949 = vpack.c.bf16 %v625, %v624
        %v950 = vpack.c.bf16 %v627, %v626
        %v951 = vpack.c.bf16 %v629, %v628
        %v952 = vpack.c.bf16 %v631, %v630
        %v953 = vpack.c.bf16 %v633, %v632
        %v954 = vpack.c.bf16 %v635, %v634
        %v955 = vpack.c.bf16 %v637, %v636
        %v956 = vpack.c.bf16 %v639, %v638
        %v957 = vpack.c.bf16 %v641, %v640
        %v958 = vpack.c.bf16 %v643, %v642
        %v991 = vunpack.c.l.b16 %v911
        %v992 = vunpack.c.h.b16 %v911
        %v993 = vunpack.c.l.b16 %v912
        %v994 = vunpack.c.h.b16 %v912
        %v995 = vunpack.c.l.b16 %v913
        %v996 = vunpack.c.h.b16 %v913
        %v997 = vunpack.c.l.b16 %v914
        %v998 = vunpack.c.h.b16 %v914
        %v999 = vunpack.c.l.b16 %v915
        %v1000 = vunpack.c.h.b16 %v915
        %v1001 = vunpack.c.l.b16 %v916
        %v1002 = vunpack.c.h.b16 %v916
        %v1003 = vunpack.c.l.b16 %v917
        %v1004 = vunpack.c.h.b16 %v917
        %v1005 = vunpack.c.l.b16 %v918
        %v1006 = vunpack.c.h.b16 %v918
        %v1007 = vunpack.c.l.b16 %v919
        %v1008 = vunpack.c.h.b16 %v919
        %v1009 = vunpack.c.l.b16 %v920
        %v1010 = vunpack.c.h.b16 %v920
        %v1011 = vunpack.c.l.b16 %v921
        %v1012 = vunpack.c.h.b16 %v921
        %v1013 = vunpack.c.l.b16 %v922
        %v1014 = vunpack.c.h.b16 %v922
        %v1015 = vunpack.c.l.b16 %v923
        %v1016 = vunpack.c.h.b16 %v923
        %v1017 = vunpack.c.l.b16 %v924
        %v1018 = vunpack.c.h.b16 %v924
        %v1019 = vunpack.c.l.b16 %v925
        %v1020 = vunpack.c.h.b16 %v925
        %v1021 = vunpack.c.l.b16 %v926
        %v1022 = vunpack.c.h.b16 %v926
        %v1023 = vunpack.c.l.b16 %v927
        %v1024 = vunpack.c.h.b16 %v927
        %v1025 = vunpack.c.l.b16 %v928
        %v1026 = vunpack.c.h.b16 %v928
        %v1027 = vunpack.c.l.b16 %v929
        %v1028 = vunpack.c.h.b16 %v929
        %v1029 = vunpack.c.l.b16 %v930
        %v1030 = vunpack.c.h.b16 %v930
        %v1031 = vunpack.c.l.b16 %v931
        %v1032 = vunpack.c.h.b16 %v931
        %v1033 = vunpack.c.l.b16 %v932
        %v1034 = vunpack.c.h.b16 %v932
        %v1035 = vunpack.c.l.b16 %v933
        %v1036 = vunpack.c.h.b16 %v933
        %v1037 = vunpack.c.l.b16 %v934
        %v1038 = vunpack.c.h.b16 %v934
        %v1039 = vunpack.c.l.b16 %v935
        %v1040 = vunpack.c.h.b16 %v935
        %v1041 = vunpack.c.l.b16 %v936
        %v1042 = vunpack.c.h.b16 %v936
        %v1043 = vunpack.c.l.b16 %v937
        %v1044 = vunpack.c.h.b16 %v937
        %v1045 = vunpack.c.l.b16 %v938
        %v1046 = vunpack.c.h.b16 %v938
        %v1047 = vunpack.c.l.b16 %v939
        %v1048 = vunpack.c.h.b16 %v939
        %v1049 = vunpack.c.l.b16 %v940
        %v1050 = vunpack.c.h.b16 %v940
        %v1051 = vunpack.c.l.b16 %v941
        %v1052 = vunpack.c.h.b16 %v941
        %v1053 = vunpack.c.l.b16 %v942
        %v1054 = vunpack.c.h.b16 %v942
        %v1055 = vpack.c.b16 %v993, %v991
        %v1056 = vpack.c.b16 %v994, %v992
        %v1057 = vpack.c.b16 %v997, %v995
        %v1058 = vpack.c.b16 %v998, %v996
        %v1059 = vpack.c.b16 %v1001, %v999
        %v1060 = vpack.c.b16 %v1002, %v1000
        %v1061 = vpack.c.b16 %v1005, %v1003
        %v1062 = vpack.c.b16 %v1006, %v1004
        %v1063 = vpack.c.b16 %v1009, %v1007
        %v1064 = vpack.c.b16 %v1010, %v1008
        %v1065 = vpack.c.b16 %v1013, %v1011
        %v1066 = vpack.c.b16 %v1014, %v1012
        %v1067 = vpack.c.b16 %v1017, %v1015
        %v1068 = vpack.c.b16 %v1018, %v1016
        %v1069 = vpack.c.b16 %v1021, %v1019
        %v1070 = vpack.c.b16 %v1022, %v1020
        %v1071 = vpack.c.b16 %v1025, %v1023
        %v1072 = vpack.c.b16 %v1026, %v1024
        %v1073 = vpack.c.b16 %v1029, %v1027
        %v1074 = vpack.c.b16 %v1030, %v1028
        %v1075 = vpack.c.b16 %v1033, %v1031
        %v1076 = vpack.c.b16 %v1034, %v1032
        %v1077 = vpack.c.b16 %v1037, %v1035
        %v1078 = vpack.c.b16 %v1038, %v1036
        %v1079 = vpack.c.b16 %v1041, %v1039
        %v1080 = vpack.c.b16 %v1042, %v1040
        %v1081 = vpack.c.b16 %v1045, %v1043
        %v1082 = vpack.c.b16 %v1046, %v1044
        %v1083 = vpack.c.b16 %v1049, %v1047
        %v1084 = vpack.c.b16 %v1050, %v1048
        %v1085 = vpack.c.b16 %v1053, %v1051
        %v1086 = vpack.c.b16 %v1054, %v1052
        %1119 = vmatprep.subr.bf16.mxu0 0
        %1120 = vmatpush1.bf16.msra.mxu0 %v943
        %1121 = vmatprep.subr.bf16.mxu0 0
        %1122 = vmatpush1.bf16.msra.mxu0 %v944
        %1123 = vmatprep.subr.bf16.mxu0 0
        %1124 = vmatpush1.bf16.msra.mxu0 %v945
        %1125 = vmatprep.subr.bf16.mxu0 0
        %1126 = vmatpush1.bf16.msra.mxu0 %v946
        %1127 = vmatprep.subr.bf16.mxu0 0
        %1128 = vmatpush1.bf16.msra.mxu0 %v947
        %1129 = vmatprep.subr.bf16.mxu0 0
        %1130 = vmatpush1.bf16.msra.mxu0 %v948
        %1131 = vmatprep.subr.bf16.mxu0 0
        %1132 = vmatpush1.bf16.msra.mxu0 %v949
        %1133 = vmatprep.subr.bf16.mxu0 0
        %1134 = vmatpush1.bf16.msra.mxu0 %v950
        %1135 = vmatprep.subr.bf16.mxu0 0
        %1136 = vmatpush1.bf16.msra.mxu0 %v951
        %1137 = vmatprep.subr.bf16.mxu0 0
        %1138 = vmatpush1.bf16.msra.mxu0 %v952
        %1139 = vmatprep.subr.bf16.mxu0 0
        %1140 = vmatpush1.bf16.msra.mxu0 %v953
        %1141 = vmatprep.subr.bf16.mxu0 0
        %1142 = vmatpush1.bf16.msra.mxu0 %v954
        %1143 = vmatprep.subr.bf16.mxu0 0
        %1144 = vmatpush1.bf16.msra.mxu0 %v955
        %1145 = vmatprep.subr.bf16.mxu0 0
        %1146 = vmatpush1.bf16.msra.mxu0 %v956
        %1147 = vmatprep.subr.bf16.mxu0 0
        %1148 = vmatpush1.bf16.msra.mxu0 %v957
        %1149 = vmatprep.subr.bf16.mxu0 0
        %1150 = vmatpush1.bf16.msra.mxu0 %v958
        %1151 = vmatprep.mubr.bf16.mxu0 %v1056
        %1152 = vmatmul.mubr.bf16.gmra.mrb[0].mxu0 %v1055
        %v1153 = vpop.f32.mrb[0].mxu0
        %v1154 = vadd.f32 0.0, %v1153
        %v1155 = vpop.f32.mrb[0].mxu0
        %v1156 = vpop.f32.mrb[0].mxu0
        %v1157 = vadd.f32 0.0, %v1156
        %v1158 = vpop.f32.mrb[0].mxu0
        %1159 = vmatprep.mubr.bf16.mxu0 %v1058
        %1160 = vmatmul.mubr.bf16.gmra.mrb[0].mxu0 %v1057
        %v1161 = vpop.f32.mrb[0].mxu0
        %v1162 = vadd.f32 0.0, %v1161
        %v1163 = vpop.f32.mrb[0].mxu0
        %v1164 = vpop.f32.mrb[0].mxu0
        %v1165 = vadd.f32 0.0, %v1164
        %v1166 = vpop.f32.mrb[0].mxu0
        %1167 = vmatprep.mubr.bf16.mxu0 %v1060
        %1168 = vmatmul.mubr.bf16.gmra.mrb[0].mxu0 %v1059
        %v1169 = vpop.f32.mrb[0].mxu0
        %v1170 = vadd.f32 0.0, %v1169
        %v1171 = vpop.f32.mrb[0].mxu0
        %v1172 = vpop.f32.mrb[0].mxu0
        %v1173 = vadd.f32 0.0, %v1172
        %v1174 = vpop.f32.mrb[0].mxu0
        %1175 = vmatprep.mubr.bf16.mxu0 %v1062
        %1176 = vmatmul.mubr.bf16.gmra.mrb[0].mxu0 %v1061
        %v1177 = vpop.f32.mrb[0].mxu0
        %v1178 = vadd.f32 0.0, %v1177
        %v1179 = vpop.f32.mrb[0].mxu0
        %v1180 = vpop.f32.mrb[0].mxu0
        %v1181 = vadd.f32 0.0, %v1180
        %v1182 = vpop.f32.mrb[0].mxu0
        %1183 = vmatprep.mubr.bf16.mxu0 %v1064
        %1184 = vmatmul.mubr.bf16.gmra.mrb[0].mxu0 %v1063
        %v1185 = vpop.f32.mrb[0].mxu0
        %v1186 = vadd.f32 0.0, %v1185
        %v1187 = vpop.f32.mrb[0].mxu0
        %v1188 = vpop.f32.mrb[0].mxu0
        %v1189 = vadd.f32 0.0, %v1188
        %v1190 = vpop.f32.mrb[0].mxu0
        %1191 = vmatprep.mubr.bf16.mxu0 %v1066
        %1192 = vmatmul.mubr.bf16.gmra.mrb[0].mxu0 %v1065
        %v1193 = vpop.f32.mrb[0].mxu0
        %v1194 = vadd.f32 0.0, %v1193
        %v1195 = vpop.f32.mrb[0].mxu0
        %v1196 = vpop.f32.mrb[0].mxu0
        %v1197 = vadd.f32 0.0, %v1196
        %v1198 = vpop.f32.mrb[0].mxu0
        %1199 = vmatprep.mubr.bf16.mxu0 %v1068
        %1200 = vmatmul.mubr.bf16.gmra.mrb[0].mxu0 %v1067
        %v1201 = vpop.f32.mrb[0].mxu0
        %v1202 = vadd.f32 0.0, %v1201
        %v1203 = vpop.f32.mrb[0].mxu0
        %v1204 = vpop.f32.mrb[0].mxu0
        %v1205 = vadd.f32 0.0, %v1204
        %v1206 = vpop.f32.mrb[0].mxu0
        %1207 = vmatprep.mubr.bf16.mxu0 %v1070
        %1208 = vmatmul.mubr.bf16.gmra.mrb[0].mxu0 %v1069
        %v1209 = vpop.f32.mrb[0].mxu0
        %v1210 = vadd.f32 0.0, %v1209
        %v1211 = vpop.f32.mrb[0].mxu0
        %v1212 = vpop.f32.mrb[0].mxu0
        %v1213 = vadd.f32 0.0, %v1212
        %v1214 = vpop.f32.mrb[0].mxu0
        %1215 = vmatprep.mubr.bf16.mxu0 %v1072
        %1216 = vmatmul.mubr.bf16.gmra.mrb[0].mxu0 %v1071
        %v1217 = vpop.f32.mrb[0].mxu0
        %v1218 = vadd.f32 0.0, %v1217
        %v1219 = vpop.f32.mrb[0].mxu0
        %v1220 = vpop.f32.mrb[0].mxu0
        %v1221 = vadd.f32 0.0, %v1220
        %v1222 = vpop.f32.mrb[0].mxu0
        %1223 = vmatprep.mubr.bf16.mxu0 %v1074
        %1224 = vmatmul.mubr.bf16.gmra.mrb[0].mxu0 %v1073
        %v1225 = vpop.f32.mrb[0].mxu0
        %v1226 = vadd.f32 0.0, %v1225
        %v1227 = vpop.f32.mrb[0].mxu0
        %v1228 = vpop.f32.mrb[0].mxu0
        %v1229 = vadd.f32 0.0, %v1228
        %v1230 = vpop.f32.mrb[0].mxu0
        %1231 = vmatprep.mubr.bf16.mxu0 %v1076
        %1232 = vmatmul.mubr.bf16.gmra.mrb[0].mxu0 %v1075
        %v1233 = vpop.f32.mrb[0].mxu0
        %v1234 = vadd.f32 0.0, %v1233
        %v1235 = vpop.f32.mrb[0].mxu0
        %v1236 = vpop.f32.mrb[0].mxu0
        %v1237 = vadd.f32 0.0, %v1236
        %v1238 = vpop.f32.mrb[0].mxu0
        %1239 = vmatprep.mubr.bf16.mxu0 %v1078
        %1240 = vmatmul.mubr.bf16.gmra.mrb[0].mxu0 %v1077
        %v1241 = vpop.f32.mrb[0].mxu0
        %v1242 = vadd.f32 0.0, %v1241
        %v1243 = vpop.f32.mrb[0].mxu0
        %v1244 = vpop.f32.mrb[0].mxu0
        %v1245 = vadd.f32 0.0, %v1244
        %v1246 = vpop.f32.mrb[0].mxu0
        %1247 = vmatprep.mubr.bf16.mxu0 %v1080
        %1248 = vmatmul.mubr.bf16.gmra.mrb[0].mxu0 %v1079
        %v1249 = vpop.f32.mrb[0].mxu0
        %v1250 = vadd.f32 0.0, %v1249
        %v1251 = vpop.f32.mrb[0].mxu0
        %v1252 = vpop.f32.mrb[0].mxu0
        %v1253 = vadd.f32 0.0, %v1252
        %v1254 = vpop.f32.mrb[0].mxu0
        %1255 = vmatprep.mubr.bf16.mxu0 %v1082
        %1256 = vmatmul.mubr.bf16.gmra.mrb[0].mxu0 %v1081
        %v1257 = vpop.f32.mrb[0].mxu0
        %v1258 = vadd.f32 0.0, %v1257
        %v1259 = vpop.f32.mrb[0].mxu0
        %v1260 = vpop.f32.mrb[0].mxu0
        %v1261 = vadd.f32 0.0, %v1260
        %v1262 = vpop.f32.mrb[0].mxu0
        %1263 = vmatprep.mubr.bf16.mxu0 %v1084
        %1264 = vmatmul.mubr.bf16.gmra.mrb[0].mxu0 %v1083
        %v1265 = vpop.f32.mrb[0].mxu0
        %v1266 = vadd.f32 0.0, %v1265
        %v1267 = vpop.f32.mrb[0].mxu0
        %v1268 = vpop.f32.mrb[0].mxu0
        %v1269 = vadd.f32 0.0, %v1268
        %v1270 = vpop.f32.mrb[0].mxu0
        %1271 = vmatprep.mubr.bf16.mxu0 %v1086
        %1272 = vmatmul.mubr.bf16.gmra.mrb[0].mxu0 %v1085
        %v1273 = vpop.f32.mrb[0].mxu0
        %v1274 = vadd.f32 0.0, %v1273
        %v1275 = vpop.f32.mrb[0].mxu0
        %v1276 = vpop.f32.mrb[0].mxu0
        %v1277 = vadd.f32 0.0, %v1276
        %v1278 = vpop.f32.mrb[0].mxu0
        %1279 = vdwg.mxu0
        %v1312 = vunpack.c.l.b16 %v862
        %v1313 = vunpack.c.h.b16 %v862
        %v1314 = vunpack.c.l.b16 %v863
        %v1315 = vunpack.c.h.b16 %v863
        %v1316 = vunpack.c.l.b16 %v864
        %v1317 = vunpack.c.h.b16 %v864
        %v1318 = vunpack.c.l.b16 %v865
        %v1319 = vunpack.c.h.b16 %v865
        %v1320 = vunpack.c.l.b16 %v866
        %v1321 = vunpack.c.h.b16 %v866
        %v1322 = vunpack.c.l.b16 %v867
        %v1323 = vunpack.c.h.b16 %v867
        %v1324 = vunpack.c.l.b16 %v868
        %v1325 = vunpack.c.h.b16 %v868
        %v1326 = vunpack.c.l.b16 %v869
        %v1327 = vunpack.c.h.b16 %v869
        %v1328 = vunpack.c.l.b16 %v870
        %v1329 = vunpack.c.h.b16 %v870
        %v1330 = vunpack.c.l.b16 %v871
        %v1331 = vunpack.c.h.b16 %v871
        %v1332 = vunpack.c.l.b16 %v872
        %v1333 = vunpack.c.h.b16 %v872
        %v1334 = vunpack.c.l.b16 %v873
        %v1335 = vunpack.c.h.b16 %v873
        %v1336 = vunpack.c.l.b16 %v874
        %v1337 = vunpack.c.h.b16 %v874
        %v1338 = vunpack.c.l.b16 %v875
        %v1339 = vunpack.c.h.b16 %v875
        %v1340 = vunpack.c.l.b16 %v876
        %v1341 = vunpack.c.h.b16 %v876
        %v1342 = vunpack.c.l.b16 %v877
        %v1343 = vunpack.c.h.b16 %v877
        %v1344 = vunpack.c.l.b16 %v878
        %v1345 = vunpack.c.h.b16 %v878
        %v1346 = vunpack.c.l.b16 %v879
        %v1347 = vunpack.c.h.b16 %v879
        %v1348 = vunpack.c.l.b16 %v880
        %v1349 = vunpack.c.h.b16 %v880
        %v1350 = vunpack.c.l.b16 %v881
        %v1351 = vunpack.c.h.b16 %v881
        %v1352 = vunpack.c.l.b16 %v882
        %v1353 = vunpack.c.h.b16 %v882
        %v1354 = vunpack.c.l.b16 %v883
        %v1355 = vunpack.c.h.b16 %v883
        %v1356 = vunpack.c.l.b16 %v884
        %v1357 = vunpack.c.h.b16 %v884
        %v1358 = vunpack.c.l.b16 %v885
        %v1359 = vunpack.c.h.b16 %v885
        %v1360 = vunpack.c.l.b16 %v886
        %v1361 = vunpack.c.h.b16 %v886
        %v1362 = vunpack.c.l.b16 %v887
        %v1363 = vunpack.c.h.b16 %v887
        %v1364 = vunpack.c.l.b16 %v888
        %v1365 = vunpack.c.h.b16 %v888
        %v1366 = vunpack.c.l.b16 %v889
        %v1367 = vunpack.c.h.b16 %v889
        %v1368 = vunpack.c.l.b16 %v890
        %v1369 = vunpack.c.h.b16 %v890
        %v1370 = vunpack.c.l.b16 %v891
        %v1371 = vunpack.c.h.b16 %v891
        %v1372 = vunpack.c.l.b16 %v892
        %v1373 = vunpack.c.h.b16 %v892
        %v1374 = vunpack.c.l.b16 %v893
        %v1375 = vunpack.c.h.b16 %v893
        %v1376 = vpack.c.b16 %v1314, %v1312
        %v1377 = vpack.c.b16 %v1315, %v1313
        %v1378 = vpack.c.b16 %v1318, %v1316
        %v1379 = vpack.c.b16 %v1319, %v1317
        %v1380 = vpack.c.b16 %v1322, %v1320
        %v1381 = vpack.c.b16 %v1323, %v1321
        %v1382 = vpack.c.b16 %v1326, %v1324
        %v1383 = vpack.c.b16 %v1327, %v1325
        %v1384 = vpack.c.b16 %v1330, %v1328
        %v1385 = vpack.c.b16 %v1331, %v1329
        %v1386 = vpack.c.b16 %v1334, %v1332
        %v1387 = vpack.c.b16 %v1335, %v1333
        %v1388 = vpack.c.b16 %v1338, %v1336
        %v1389 = vpack.c.b16 %v1339, %v1337
        %v1390 = vpack.c.b16 %v1342, %v1340
        %v1391 = vpack.c.b16 %v1343, %v1341
        %v1392 = vpack.c.b16 %v1346, %v1344
        %v1393 = vpack.c.b16 %v1347, %v1345
        %v1394 = vpack.c.b16 %v1350, %v1348
        %v1395 = vpack.c.b16 %v1351, %v1349
        %v1396 = vpack.c.b16 %v1354, %v1352
        %v1397 = vpack.c.b16 %v1355, %v1353
        %v1398 = vpack.c.b16 %v1358, %v1356
        %v1399 = vpack.c.b16 %v1359, %v1357
        %v1400 = vpack.c.b16 %v1362, %v1360
        %v1401 = vpack.c.b16 %v1363, %v1361
        %v1402 = vpack.c.b16 %v1366, %v1364
        %v1403 = vpack.c.b16 %v1367, %v1365
        %v1404 = vpack.c.b16 %v1370, %v1368
        %v1405 = vpack.c.b16 %v1371, %v1369
        %v1406 = vpack.c.b16 %v1374, %v1372
        %v1407 = vpack.c.b16 %v1375, %v1373
        %1440 = vmatprep.subr.bf16.mxu0 0
        %1441 = vmatpush1.bf16.msra.mxu0 %v894
        %1442 = vmatprep.subr.bf16.mxu0 0
        %1443 = vmatpush1.bf16.msra.mxu0 %v895
        %1444 = vmatprep.subr.bf16.mxu0 0
        %1445 = vmatpush1.bf16.msra.mxu0 %v896
        %1446 = vmatprep.subr.bf16.mxu0 0
        %1447 = vmatpush1.bf16.msra.mxu0 %v897
        %1448 = vmatprep.subr.bf16.mxu0 0
        %1449 = vmatpush1.bf16.msra.mxu0 %v898
        %1450 = vmatprep.subr.bf16.mxu0 0
        %1451 = vmatpush1.bf16.msra.mxu0 %v899
        %1452 = vmatprep.subr.bf16.mxu0 0
        %1453 = vmatpush1.bf16.msra.mxu0 %v900
        %1454 = vmatprep.subr.bf16.mxu0 0
        %1455 = vmatpush1.bf16.msra.mxu0 %v901
        %1456 = vmatprep.subr.bf16.mxu0 0
        %1457 = vmatpush1.bf16.msra.mxu0 %v902
        %1458 = vmatprep.subr.bf16.mxu0 0
        %1459 = vmatpush1.bf16.msra.mxu0 %v903
        %1460 = vmatprep.subr.bf16.mxu0 0
        %1461 = vmatpush1.bf16.msra.mxu0 %v904
        %1462 = vmatprep.subr.bf16.mxu0 0
        %1463 = vmatpush1.bf16.msra.mxu0 %v905
        %1464 = vmatprep.subr.bf16.mxu0 0
        %1465 = vmatpush1.bf16.msra.mxu0 %v906
        %1466 = vmatprep.subr.bf16.mxu0 0
        %1467 = vmatpush1.bf16.msra.mxu0 %v907
        %1468 = vmatprep.subr.bf16.mxu0 0
        %1469 = vmatpush1.bf16.msra.mxu0 %v908
        %1470 = vmatprep.subr.bf16.mxu0 0
        %1471 = vmatpush1.bf16.msra.mxu0 %v909
        %1472 = vmatprep.mubr.bf16.mxu0 %v1377
        %1473 = vmatmul.mubr.bf16.gmra.mrb[0].mxu0 %v1376
        %v1474 = vpop.f32.mrb[0].mxu0
        %v1475 = vadd.f32 %v1154, %v1474
        %v1476 = vpop.f32.mrb[0].mxu0
        %v1477 = vpop.f32.mrb[0].mxu0
        %v1478 = vadd.f32 %v1157, %v1477
        %v1479 = vpop.f32.mrb[0].mxu0
        %1480 = vmatprep.mubr.bf16.mxu0 %v1379
        %1481 = vmatmul.mubr.bf16.gmra.mrb[0].mxu0 %v1378
        %v1482 = vpop.f32.mrb[0].mxu0
        %v1483 = vadd.f32 %v1162, %v1482
        %v1484 = vpop.f32.mrb[0].mxu0
        %v1485 = vpop.f32.mrb[0].mxu0
        %v1486 = vadd.f32 %v1165, %v1485
        %v1487 = vpop.f32.mrb[0].mxu0
        %1488 = vmatprep.mubr.bf16.mxu0 %v1381
        %1489 = vmatmul.mubr.bf16.gmra.mrb[0].mxu0 %v1380
        %v1490 = vpop.f32.mrb[0].mxu0
        %v1491 = vadd.f32 %v1170, %v1490
        %v1492 = vpop.f32.mrb[0].mxu0
        %v1493 = vpop.f32.mrb[0].mxu0
        %v1494 = vadd.f32 %v1173, %v1493
        %v1495 = vpop.f32.mrb[0].mxu0
        %1496 = vmatprep.mubr.bf16.mxu0 %v1383
        %1497 = vmatmul.mubr.bf16.gmra.mrb[0].mxu0 %v1382
        %v1498 = vpop.f32.mrb[0].mxu0
        %v1499 = vadd.f32 %v1178, %v1498
        %v1500 = vpop.f32.mrb[0].mxu0
        %v1501 = vpop.f32.mrb[0].mxu0
        %v1502 = vadd.f32 %v1181, %v1501
        %v1503 = vpop.f32.mrb[0].mxu0
        %1504 = vmatprep.mubr.bf16.mxu0 %v1385
        %1505 = vmatmul.mubr.bf16.gmra.mrb[0].mxu0 %v1384
        %v1506 = vpop.f32.mrb[0].mxu0
        %v1507 = vadd.f32 %v1186, %v1506
        %v1508 = vpop.f32.mrb[0].mxu0
        %v1509 = vpop.f32.mrb[0].mxu0
        %v1510 = vadd.f32 %v1189, %v1509
        %v1511 = vpop.f32.mrb[0].mxu0
        %1512 = vmatprep.mubr.bf16.mxu0 %v1387
        %1513 = vmatmul.mubr.bf16.gmra.mrb[0].mxu0 %v1386
        %v1514 = vpop.f32.mrb[0].mxu0
        %v1515 = vadd.f32 %v1194, %v1514
        %v1516 = vpop.f32.mrb[0].mxu0
        %v1517 = vpop.f32.mrb[0].mxu0
        %v1518 = vadd.f32 %v1197, %v1517
        %v1519 = vpop.f32.mrb[0].mxu0
        %1520 = vmatprep.mubr.bf16.mxu0 %v1389
        %1521 = vmatmul.mubr.bf16.gmra.mrb[0].mxu0 %v1388
        %v1522 = vpop.f32.mrb[0].mxu0
        %v1523 = vadd.f32 %v1202, %v1522
        %v1524 = vpop.f32.mrb[0].mxu0
        %v1525 = vpop.f32.mrb[0].mxu0
        %v1526 = vadd.f32 %v1205, %v1525
        %v1527 = vpop.f32.mrb[0].mxu0
        %1528 = vmatprep.mubr.bf16.mxu0 %v1391
        %1529 = vmatmul.mubr.bf16.gmra.mrb[0].mxu0 %v1390
        %v1530 = vpop.f32.mrb[0].mxu0
        %v1531 = vadd.f32 %v1210, %v1530
        %v1532 = vpop.f32.mrb[0].mxu0
        %v1533 = vpop.f32.mrb[0].mxu0
        %v1534 = vadd.f32 %v1213, %v1533
        %v1535 = vpop.f32.mrb[0].mxu0
        %1536 = vmatprep.mubr.bf16.mxu0 %v1393
        %1537 = vmatmul.mubr.bf16.gmra.mrb[0].mxu0 %v1392
        %v1538 = vpop.f32.mrb[0].mxu0
        %v1539 = vadd.f32 %v1218, %v1538
        %v1540 = vpop.f32.mrb[0].mxu0
        %v1541 = vpop.f32.mrb[0].mxu0
        %v1542 = vadd.f32 %v1221, %v1541
        %v1543 = vpop.f32.mrb[0].mxu0
        %1544 = vmatprep.mubr.bf16.mxu0 %v1395
        %1545 = vmatmul.mubr.bf16.gmra.mrb[0].mxu0 %v1394
        %v1546 = vpop.f32.mrb[0].mxu0
        %v1547 = vadd.f32 %v1226, %v1546
        %v1548 = vpop.f32.mrb[0].mxu0
        %v1549 = vpop.f32.mrb[0].mxu0
        %v1550 = vadd.f32 %v1229, %v1549
        %v1551 = vpop.f32.mrb[0].mxu0
        %1552 = vmatprep.mubr.bf16.mxu0 %v1397
        %1553 = vmatmul.mubr.bf16.gmra.mrb[0].mxu0 %v1396
        %v1554 = vpop.f32.mrb[0].mxu0
        %v1555 = vadd.f32 %v1234, %v1554
        %v1556 = vpop.f32.mrb[0].mxu0
        %v1557 = vpop.f32.mrb[0].mxu0
        %v1558 = vadd.f32 %v1237, %v1557
        %v1559 = vpop.f32.mrb[0].mxu0
        %1560 = vmatprep.mubr.bf16.mxu0 %v1399
        %1561 = vmatmul.mubr.bf16.gmra.mrb[0].mxu0 %v1398
        %v1562 = vpop.f32.mrb[0].mxu0
        %v1563 = vadd.f32 %v1242, %v1562
        %v1564 = vpop.f32.mrb[0].mxu0
        %v1565 = vpop.f32.mrb[0].mxu0
        %v1566 = vadd.f32 %v1245, %v1565
        %v1567 = vpop.f32.mrb[0].mxu0
        %1568 = vmatprep.mubr.bf16.mxu0 %v1401
        %1569 = vmatmul.mubr.bf16.gmra.mrb[0].mxu0 %v1400
        %v1570 = vpop.f32.mrb[0].mxu0
        %v1571 = vadd.f32 %v1250, %v1570
        %v1572 = vpop.f32.mrb[0].mxu0
        %v1573 = vpop.f32.mrb[0].mxu0
        %v1574 = vadd.f32 %v1253, %v1573
        %v1575 = vpop.f32.mrb[0].mxu0
        %1576 = vmatprep.mubr.bf16.mxu0 %v1403
        %1577 = vmatmul.mubr.bf16.gmra.mrb[0].mxu0 %v1402
        %v1578 = vpop.f32.mrb[0].mxu0
        %v1579 = vadd.f32 %v1258, %v1578
        %v1580 = vpop.f32.mrb[0].mxu0
        %v1581 = vpop.f32.mrb[0].mxu0
        %v1582 = vadd.f32 %v1261, %v1581
        %v1583 = vpop.f32.mrb[0].mxu0
        %1584 = vmatprep.mubr.bf16.mxu0 %v1405
        %1585 = vmatmul.mubr.bf16.gmra.mrb[0].mxu0 %v1404
        %v1586 = vpop.f32.mrb[0].mxu0
        %v1587 = vadd.f32 %v1266, %v1586
        %v1588 = vpop.f32.mrb[0].mxu0
        %v1589 = vpop.f32.mrb[0].mxu0
        %v1590 = vadd.f32 %v1269, %v1589
        %v1591 = vpop.f32.mrb[0].mxu0
        %1592 = vmatprep.mubr.bf16.mxu0 %v1407
        %1593 = vmatmul.mubr.bf16.gmra.mrb[0].mxu0 %v1406
        %v1594 = vpop.f32.mrb[0].mxu0
        %v1595 = vadd.f32 %v1274, %v1594
        %v1596 = vpop.f32.mrb[0].mxu0
        %v1597 = vpop.f32.mrb[0].mxu0
        %v1598 = vadd.f32 %v1277, %v1597
        %v1599 = vpop.f32.mrb[0].mxu0
        %1600 = vdwg.mxu0
        %s1601 = scalar_lea.vmem %s572, 512 [#allocation2]
        %v1602 = vld [vmem:[%s1601] sm:$0xff]
        %v1603 = vld [vmem:[%s1601 + $0x8] sm:$0xff]
        %v1604 = vld [vmem:[%s1601 + $0x10] sm:$0xff]
        %v1605 = vld [vmem:[%s1601 + $0x18] sm:$0xff]
        %v1606 = vld [vmem:[%s1601 + $0x20] sm:$0xff]
        %v1607 = vld [vmem:[%s1601 + $0x28] sm:$0xff]
        %v1608 = vld [vmem:[%s1601 + $0x30] sm:$0xff]
        %v1609 = vld [vmem:[%s1601 + $0x38] sm:$0xff]
        %v1610 = vld [vmem:[%s1601 + $0x40] sm:$0xff]
        %v1611 = vld [vmem:[%s1601 + $0x48] sm:$0xff]
        %v1612 = vld [vmem:[%s1601 + $0x50] sm:$0xff]
        %v1613 = vld [vmem:[%s1601 + $0x58] sm:$0xff]
        %v1614 = vld [vmem:[%s1601 + $0x60] sm:$0xff]
        %v1615 = vld [vmem:[%s1601 + $0x68] sm:$0xff]
        %v1616 = vld [vmem:[%s1601 + $0x70] sm:$0xff]
        %v1617 = vld [vmem:[%s1601 + $0x78] sm:$0xff]
        %v1618 = vld [vmem:[%s1601 + $0x80] sm:$0xff]
        %v1619 = vld [vmem:[%s1601 + $0x88] sm:$0xff]
        %v1620 = vld [vmem:[%s1601 + $0x90] sm:$0xff]
        %v1621 = vld [vmem:[%s1601 + $0x98] sm:$0xff]
        %v1622 = vld [vmem:[%s1601 + $0xa0] sm:$0xff]
        %v1623 = vld [vmem:[%s1601 + $0xa8] sm:$0xff]
        %v1624 = vld [vmem:[%s1601 + $0xb0] sm:$0xff]
        %v1625 = vld [vmem:[%s1601 + $0xb8] sm:$0xff]
        %v1626 = vld [vmem:[%s1601 + $0xc0] sm:$0xff]
        %v1627 = vld [vmem:[%s1601 + $0xc8] sm:$0xff]
        %v1628 = vld [vmem:[%s1601 + $0xd0] sm:$0xff]
        %v1629 = vld [vmem:[%s1601 + $0xd8] sm:$0xff]
        %v1630 = vld [vmem:[%s1601 + $0xe0] sm:$0xff]
        %v1631 = vld [vmem:[%s1601 + $0xe8] sm:$0xff]
        %v1632 = vld [vmem:[%s1601 + $0xf0] sm:$0xff]
        %v1633 = vld [vmem:[%s1601 + $0xf8] sm:$0xff]
        %v1634 = vpack.c.bf16 %v831, %v830
        %v1635 = vpack.c.bf16 %v833, %v832
        %v1636 = vpack.c.bf16 %v835, %v834
        %v1637 = vpack.c.bf16 %v837, %v836
        %v1638 = vpack.c.bf16 %v839, %v838
        %v1639 = vpack.c.bf16 %v841, %v840
        %v1640 = vpack.c.bf16 %v843, %v842
        %v1641 = vpack.c.bf16 %v845, %v844
        %v1642 = vpack.c.bf16 %v847, %v846
        %v1643 = vpack.c.bf16 %v849, %v848
        %v1644 = vpack.c.bf16 %v851, %v850
        %v1645 = vpack.c.bf16 %v853, %v852
        %v1646 = vpack.c.bf16 %v855, %v854
        %v1647 = vpack.c.bf16 %v857, %v856
        %v1648 = vpack.c.bf16 %v859, %v858
        %v1649 = vpack.c.bf16 %v861, %v860
        %v1682 = vunpack.c.l.b16 %v1602
        %v1683 = vunpack.c.h.b16 %v1602
        %v1684 = vunpack.c.l.b16 %v1603
        %v1685 = vunpack.c.h.b16 %v1603
        %v1686 = vunpack.c.l.b16 %v1604
        %v1687 = vunpack.c.h.b16 %v1604
        %v1688 = vunpack.c.l.b16 %v1605
        %v1689 = vunpack.c.h.b16 %v1605
        %v1690 = vunpack.c.l.b16 %v1606
        %v1691 = vunpack.c.h.b16 %v1606
        %v1692 = vunpack.c.l.b16 %v1607
        %v1693 = vunpack.c.h.b16 %v1607
        %v1694 = vunpack.c.l.b16 %v1608
        %v1695 = vunpack.c.h.b16 %v1608
        %v1696 = vunpack.c.l.b16 %v1609
        %v1697 = vunpack.c.h.b16 %v1609
        %v1698 = vunpack.c.l.b16 %v1610
        %v1699 = vunpack.c.h.b16 %v1610
        %v1700 = vunpack.c.l.b16 %v1611
        %v1701 = vunpack.c.h.b16 %v1611
        %v1702 = vunpack.c.l.b16 %v1612
        %v1703 = vunpack.c.h.b16 %v1612
        %v1704 = vunpack.c.l.b16 %v1613
        %v1705 = vunpack.c.h.b16 %v1613
        %v1706 = vunpack.c.l.b16 %v1614
        %v1707 = vunpack.c.h.b16 %v1614
        %v1708 = vunpack.c.l.b16 %v1615
        %v1709 = vunpack.c.h.b16 %v1615
        %v1710 = vunpack.c.l.b16 %v1616
        %v1711 = vunpack.c.h.b16 %v1616
        %v1712 = vunpack.c.l.b16 %v1617
        %v1713 = vunpack.c.h.b16 %v1617
        %v1714 = vunpack.c.l.b16 %v1618
        %v1715 = vunpack.c.h.b16 %v1618
        %v1716 = vunpack.c.l.b16 %v1619
        %v1717 = vunpack.c.h.b16 %v1619
        %v1718 = vunpack.c.l.b16 %v1620
        %v1719 = vunpack.c.h.b16 %v1620
        %v1720 = vunpack.c.l.b16 %v1621
        %v1721 = vunpack.c.h.b16 %v1621
        %v1722 = vunpack.c.l.b16 %v1622
        %v1723 = vunpack.c.h.b16 %v1622
        %v1724 = vunpack.c.l.b16 %v1623
        %v1725 = vunpack.c.h.b16 %v1623
        %v1726 = vunpack.c.l.b16 %v1624
        %v1727 = vunpack.c.h.b16 %v1624
        %v1728 = vunpack.c.l.b16 %v1625
        %v1729 = vunpack.c.h.b16 %v1625
        %v1730 = vunpack.c.l.b16 %v1626
        %v1731 = vunpack.c.h.b16 %v1626
        %v1732 = vunpack.c.l.b16 %v1627
        %v1733 = vunpack.c.h.b16 %v1627
        %v1734 = vunpack.c.l.b16 %v1628
        %v1735 = vunpack.c.h.b16 %v1628
        %v1736 = vunpack.c.l.b16 %v1629
        %v1737 = vunpack.c.h.b16 %v1629
        %v1738 = vunpack.c.l.b16 %v1630
        %v1739 = vunpack.c.h.b16 %v1630
        %v1740 = vunpack.c.l.b16 %v1631
        %v1741 = vunpack.c.h.b16 %v1631
        %v1742 = vunpack.c.l.b16 %v1632
        %v1743 = vunpack.c.h.b16 %v1632
        %v1744 = vunpack.c.l.b16 %v1633
        %v1745 = vunpack.c.h.b16 %v1633
        %v1746 = vpack.c.b16 %v1684, %v1682
        %v1747 = vpack.c.b16 %v1685, %v1683
        %v1748 = vpack.c.b16 %v1688, %v1686
        %v1749 = vpack.c.b16 %v1689, %v1687
        %v1750 = vpack.c.b16 %v1692, %v1690
        %v1751 = vpack.c.b16 %v1693, %v1691
        %v1752 = vpack.c.b16 %v1696, %v1694
        %v1753 = vpack.c.b16 %v1697, %v1695
        %v1754 = vpack.c.b16 %v1700, %v1698
        %v1755 = vpack.c.b16 %v1701, %v1699
        %v1756 = vpack.c.b16 %v1704, %v1702
        %v1757 = vpack.c.b16 %v1705, %v1703
        %v1758 = vpack.c.b16 %v1708, %v1706
        %v1759 = vpack.c.b16 %v1709, %v1707
        %v1760 = vpack.c.b16 %v1712, %v1710
        %v1761 = vpack.c.b16 %v1713, %v1711
        %v1762 = vpack.c.b16 %v1716, %v1714
        %v1763 = vpack.c.b16 %v1717, %v1715
        %v1764 = vpack.c.b16 %v1720, %v1718
        %v1765 = vpack.c.b16 %v1721, %v1719
        %v1766 = vpack.c.b16 %v1724, %v1722
        %v1767 = vpack.c.b16 %v1725, %v1723
        %v1768 = vpack.c.b16 %v1728, %v1726
        %v1769 = vpack.c.b16 %v1729, %v1727
        %v1770 = vpack.c.b16 %v1732, %v1730
        %v1771 = vpack.c.b16 %v1733, %v1731
        %v1772 = vpack.c.b16 %v1736, %v1734
        %v1773 = vpack.c.b16 %v1737, %v1735
        %v1774 = vpack.c.b16 %v1740, %v1738
        %v1775 = vpack.c.b16 %v1741, %v1739
        %v1776 = vpack.c.b16 %v1744, %v1742
        %v1777 = vpack.c.b16 %v1745, %v1743
        %1810 = vmatprep.subr.bf16.mxu0 0
        %1811 = vmatpush1.bf16.msra.mxu0 %v1634
        %1812 = vmatprep.subr.bf16.mxu0 0
        %1813 = vmatpush1.bf16.msra.mxu0 %v1635
        %1814 = vmatprep.subr.bf16.mxu0 0
        %1815 = vmatpush1.bf16.msra.mxu0 %v1636
        %1816 = vmatprep.subr.bf16.mxu0 0
        %1817 = vmatpush1.bf16.msra.mxu0 %v1637
        %1818 = vmatprep.subr.bf16.mxu0 0
        %1819 = vmatpush1.bf16.msra.mxu0 %v1638
        %1820 = vmatprep.subr.bf16.mxu0 0
        %1821 = vmatpush1.bf16.msra.mxu0 %v1639
        %1822 = vmatprep.subr.bf16.mxu0 0
        %1823 = vmatpush1.bf16.msra.mxu0 %v1640
        %1824 = vmatprep.subr.bf16.mxu0 0
        %1825 = vmatpush1.bf16.msra.mxu0 %v1641
        %1826 = vmatprep.subr.bf16.mxu0 0
        %1827 = vmatpush1.bf16.msra.mxu0 %v1642
        %1828 = vmatprep.subr.bf16.mxu0 0
        %1829 = vmatpush1.bf16.msra.mxu0 %v1643
        %1830 = vmatprep.subr.bf16.mxu0 0
        %1831 = vmatpush1.bf16.msra.mxu0 %v1644
        %1832 = vmatprep.subr.bf16.mxu0 0
        %1833 = vmatpush1.bf16.msra.mxu0 %v1645
        %1834 = vmatprep.subr.bf16.mxu0 0
        %1835 = vmatpush1.bf16.msra.mxu0 %v1646
        %1836 = vmatprep.subr.bf16.mxu0 0
        %1837 = vmatpush1.bf16.msra.mxu0 %v1647
        %1838 = vmatprep.subr.bf16.mxu0 0
        %1839 = vmatpush1.bf16.msra.mxu0 %v1648
        %1840 = vmatprep.subr.bf16.mxu0 0
        %1841 = vmatpush1.bf16.msra.mxu0 %v1649
        %1842 = vmatprep.mubr.bf16.mxu0 %v1747
        %1843 = vmatmul.mubr.bf16.gmra.mrb[0].mxu0 %v1746
        %v1844 = vpop.f32.mrb[0].mxu0
        %v1845 = vadd.f32 0.0, %v1844
        %v1846 = vpop.f32.mrb[0].mxu0
        %v1847 = vpop.f32.mrb[0].mxu0
        %v1848 = vadd.f32 0.0, %v1847
        %v1849 = vpop.f32.mrb[0].mxu0
        %1850 = vmatprep.mubr.bf16.mxu0 %v1749
        %1851 = vmatmul.mubr.bf16.gmra.mrb[0].mxu0 %v1748
        %v1852 = vpop.f32.mrb[0].mxu0
        %v1853 = vadd.f32 0.0, %v1852
        %v1854 = vpop.f32.mrb[0].mxu0
        %v1855 = vpop.f32.mrb[0].mxu0
        %v1856 = vadd.f32 0.0, %v1855
        %v1857 = vpop.f32.mrb[0].mxu0
        %1858 = vmatprep.mubr.bf16.mxu0 %v1751
        %1859 = vmatmul.mubr.bf16.gmra.mrb[0].mxu0 %v1750
        %v1860 = vpop.f32.mrb[0].mxu0
        %v1861 = vadd.f32 0.0, %v1860
        %v1862 = vpop.f32.mrb[0].mxu0
        %v1863 = vpop.f32.mrb[0].mxu0
        %v1864 = vadd.f32 0.0, %v1863
        %v1865 = vpop.f32.mrb[0].mxu0
        %1866 = vmatprep.mubr.bf16.mxu0 %v1753
        %1867 = vmatmul.mubr.bf16.gmra.mrb[0].mxu0 %v1752
        %v1868 = vpop.f32.mrb[0].mxu0
        %v1869 = vadd.f32 0.0, %v1868
        %v1870 = vpop.f32.mrb[0].mxu0
        %v1871 = vpop.f32.mrb[0].mxu0
        %v1872 = vadd.f32 0.0, %v1871
        %v1873 = vpop.f32.mrb[0].mxu0
        %1874 = vmatprep.mubr.bf16.mxu0 %v1755
        %1875 = vmatmul.mubr.bf16.gmra.mrb[0].mxu0 %v1754
        %v1876 = vpop.f32.mrb[0].mxu0
        %v1877 = vadd.f32 0.0, %v1876
        %v1878 = vpop.f32.mrb[0].mxu0
        %v1879 = vpop.f32.mrb[0].mxu0
        %v1880 = vadd.f32 0.0, %v1879
        %v1881 = vpop.f32.mrb[0].mxu0
        %1882 = vmatprep.mubr.bf16.mxu0 %v1757
        %1883 = vmatmul.mubr.bf16.gmra.mrb[0].mxu0 %v1756
        %v1884 = vpop.f32.mrb[0].mxu0
        %v1885 = vadd.f32 0.0, %v1884
        %v1886 = vpop.f32.mrb[0].mxu0
        %v1887 = vpop.f32.mrb[0].mxu0
        %v1888 = vadd.f32 0.0, %v1887
        %v1889 = vpop.f32.mrb[0].mxu0
        %1890 = vmatprep.mubr.bf16.mxu0 %v1759
        %1891 = vmatmul.mubr.bf16.gmra.mrb[0].mxu0 %v1758
        %v1892 = vpop.f32.mrb[0].mxu0
        %v1893 = vadd.f32 0.0, %v1892
        %v1894 = vpop.f32.mrb[0].mxu0
        %v1895 = vpop.f32.mrb[0].mxu0
        %v1896 = vadd.f32 0.0, %v1895
        %v1897 = vpop.f32.mrb[0].mxu0
        %1898 = vmatprep.mubr.bf16.mxu0 %v1761
        %1899 = vmatmul.mubr.bf16.gmra.mrb[0].mxu0 %v1760
        %v1900 = vpop.f32.mrb[0].mxu0
        %v1901 = vadd.f32 0.0, %v1900
        %v1902 = vpop.f32.mrb[0].mxu0
        %v1903 = vpop.f32.mrb[0].mxu0
        %v1904 = vadd.f32 0.0, %v1903
        %v1905 = vpop.f32.mrb[0].mxu0
        %1906 = vmatprep.mubr.bf16.mxu0 %v1763
        %1907 = vmatmul.mubr.bf16.gmra.mrb[0].mxu0 %v1762
        %v1908 = vpop.f32.mrb[0].mxu0
        %v1909 = vadd.f32 0.0, %v1908
        %v1910 = vpop.f32.mrb[0].mxu0
        %v1911 = vpop.f32.mrb[0].mxu0
        %v1912 = vadd.f32 0.0, %v1911
        %v1913 = vpop.f32.mrb[0].mxu0
        %1914 = vmatprep.mubr.bf16.mxu0 %v1765
        %1915 = vmatmul.mubr.bf16.gmra.mrb[0].mxu0 %v1764
        %v1916 = vpop.f32.mrb[0].mxu0
        %v1917 = vadd.f32 0.0, %v1916
        %v1918 = vpop.f32.mrb[0].mxu0
        %v1919 = vpop.f32.mrb[0].mxu0
        %v1920 = vadd.f32 0.0, %v1919
        %v1921 = vpop.f32.mrb[0].mxu0
        %1922 = vmatprep.mubr.bf16.mxu0 %v1767
        %1923 = vmatmul.mubr.bf16.gmra.mrb[0].mxu0 %v1766
        %v1924 = vpop.f32.mrb[0].mxu0
        %v1925 = vadd.f32 0.0, %v1924
        %v1926 = vpop.f32.mrb[0].mxu0
        %v1927 = vpop.f32.mrb[0].mxu0
        %v1928 = vadd.f32 0.0, %v1927
        %v1929 = vpop.f32.mrb[0].mxu0
        %1930 = vmatprep.mubr.bf16.mxu0 %v1769
        %1931 = vmatmul.mubr.bf16.gmra.mrb[0].mxu0 %v1768
        %v1932 = vpop.f32.mrb[0].mxu0
        %v1933 = vadd.f32 0.0, %v1932
        %v1934 = vpop.f32.mrb[0].mxu0
        %v1935 = vpop.f32.mrb[0].mxu0
        %v1936 = vadd.f32 0.0, %v1935
        %v1937 = vpop.f32.mrb[0].mxu0
        %1938 = vmatprep.mubr.bf16.mxu0 %v1771
        %1939 = vmatmul.mubr.bf16.gmra.mrb[0].mxu0 %v1770
        %v1940 = vpop.f32.mrb[0].mxu0
        %v1941 = vadd.f32 0.0, %v1940
        %v1942 = vpop.f32.mrb[0].mxu0
        %v1943 = vpop.f32.mrb[0].mxu0
        %v1944 = vadd.f32 0.0, %v1943
        %v1945 = vpop.f32.mrb[0].mxu0
        %1946 = vmatprep.mubr.bf16.mxu0 %v1773
        %1947 = vmatmul.mubr.bf16.gmra.mrb[0].mxu0 %v1772
        %v1948 = vpop.f32.mrb[0].mxu0
        %v1949 = vadd.f32 0.0, %v1948
        %v1950 = vpop.f32.mrb[0].mxu0
        %v1951 = vpop.f32.mrb[0].mxu0
        %v1952 = vadd.f32 0.0, %v1951
        %v1953 = vpop.f32.mrb[0].mxu0
        %1954 = vmatprep.mubr.bf16.mxu0 %v1775
        %1955 = vmatmul.mubr.bf16.gmra.mrb[0].mxu0 %v1774
        %v1956 = vpop.f32.mrb[0].mxu0
        %v1957 = vadd.f32 0.0, %v1956
        %v1958 = vpop.f32.mrb[0].mxu0
        %v1959 = vpop.f32.mrb[0].mxu0
        %v1960 = vadd.f32 0.0, %v1959
        %v1961 = vpop.f32.mrb[0].mxu0
        %1962 = vmatprep.mubr.bf16.mxu0 %v1777
        %1963 = vmatmul.mubr.bf16.gmra.mrb[0].mxu0 %v1776
        %v1964 = vpop.f32.mrb[0].mxu0
        %v1965 = vadd.f32 0.0, %v1964
        %v1966 = vpop.f32.mrb[0].mxu0
        %v1967 = vpop.f32.mrb[0].mxu0
        %v1968 = vadd.f32 0.0, %v1967
        %v1969 = vpop.f32.mrb[0].mxu0
        %1970 = vdwg.mxu0
        %v1971 = vadd.f32 %v1475, %v1845
        %v1972 = vadd.f32 %v1478, %v1848
        %v1973 = vadd.f32 %v1483, %v1853
        %v1974 = vadd.f32 %v1486, %v1856
        %v1975 = vadd.f32 %v1491, %v1861
        %v1976 = vadd.f32 %v1494, %v1864
        %v1977 = vadd.f32 %v1499, %v1869
        %v1978 = vadd.f32 %v1502, %v1872
        %v1979 = vadd.f32 %v1507, %v1877
        %v1980 = vadd.f32 %v1510, %v1880
        %v1981 = vadd.f32 %v1515, %v1885
        %v1982 = vadd.f32 %v1518, %v1888
        %v1983 = vadd.f32 %v1523, %v1893
        %v1984 = vadd.f32 %v1526, %v1896
        %v1985 = vadd.f32 %v1531, %v1901
        %v1986 = vadd.f32 %v1534, %v1904
        %v1987 = vadd.f32 %v1539, %v1909
        %v1988 = vadd.f32 %v1542, %v1912
        %v1989 = vadd.f32 %v1547, %v1917
        %v1990 = vadd.f32 %v1550, %v1920
        %v1991 = vadd.f32 %v1555, %v1925
        %v1992 = vadd.f32 %v1558, %v1928
        %v1993 = vadd.f32 %v1563, %v1933
        %v1994 = vadd.f32 %v1566, %v1936
        %v1995 = vadd.f32 %v1571, %v1941
        %v1996 = vadd.f32 %v1574, %v1944
        %v1997 = vadd.f32 %v1579, %v1949
        %v1998 = vadd.f32 %v1582, %v1952
        %v1999 = vadd.f32 %v1587, %v1957
        %v2000 = vadd.f32 %v1590, %v1960
        %v2001 = vadd.f32 %v1595, %v1965
        %v2002 = vadd.f32 %v1598, %v1968
        %v2003 = vld [vmem:[%s603] sm:$0xff]
        %v2004 = vld [vmem:[%s603 + $0x8] sm:$0xff]
        %v2005 = vld [vmem:[%s603 + $0x10] sm:$0xff]
        %v2006 = vld [vmem:[%s603 + $0x18] sm:$0xff]
        %v2007 = vld [vmem:[%s603 + $0x20] sm:$0xff]
        %v2008 = vld [vmem:[%s603 + $0x28] sm:$0xff]
        %v2009 = vld [vmem:[%s603 + $0x30] sm:$0xff]
        %v2010 = vld [vmem:[%s603 + $0x38] sm:$0xff]
        %v2011 = vld [vmem:[%s603 + $0x40] sm:$0xff]
        %v2012 = vld [vmem:[%s603 + $0x48] sm:$0xff]
        %v2013 = vld [vmem:[%s603 + $0x50] sm:$0xff]
        %v2014 = vld [vmem:[%s603 + $0x58] sm:$0xff]
        %v2015 = vld [vmem:[%s603 + $0x60] sm:$0xff]
        %v2016 = vld [vmem:[%s603 + $0x68] sm:$0xff]
        %v2017 = vld [vmem:[%s603 + $0x70] sm:$0xff]
        %v2018 = vld [vmem:[%s603 + $0x78] sm:$0xff]
        %v2019 = vld [vmem:[%s603 + $0x80] sm:$0xff]
        %v2020 = vld [vmem:[%s603 + $0x88] sm:$0xff]
        %v2021 = vld [vmem:[%s603 + $0x90] sm:$0xff]
        %v2022 = vld [vmem:[%s603 + $0x98] sm:$0xff]
        %v2023 = vld [vmem:[%s603 + $0xa0] sm:$0xff]
        %v2024 = vld [vmem:[%s603 + $0xa8] sm:$0xff]
        %v2025 = vld [vmem:[%s603 + $0xb0] sm:$0xff]
        %v2026 = vld [vmem:[%s603 + $0xb8] sm:$0xff]
        %v2027 = vld [vmem:[%s603 + $0xc0] sm:$0xff]
        %v2028 = vld [vmem:[%s603 + $0xc8] sm:$0xff]
        %v2029 = vld [vmem:[%s603 + $0xd0] sm:$0xff]
        %v2030 = vld [vmem:[%s603 + $0xd8] sm:$0xff]
        %v2031 = vld [vmem:[%s603 + $0xe0] sm:$0xff]
        %v2032 = vld [vmem:[%s603 + $0xe8] sm:$0xff]
        %v2033 = vld [vmem:[%s603 + $0xf0] sm:$0xff]
        %v2034 = vld [vmem:[%s603 + $0xf8] sm:$0xff]
        %2035 = vrot.lane.b32.xlu0 %v1971, 7
        %v2036 = vpop.permute.xlu0 %2035
        %2037 = vrot.lane.b32.xlu0 %v1972, 7
        %v2038 = vpop.permute.xlu0 %2037
        %2039 = vrot.lane.b32.xlu0 %v1973, 7
        %v2040 = vpop.permute.xlu0 %2039
        %2041 = vrot.lane.b32.xlu0 %v1974, 7
        %v2042 = vpop.permute.xlu0 %2041
        %2043 = vrot.lane.b32.xlu0 %v1975, 7
        %v2044 = vpop.permute.xlu0 %2043
        %2045 = vrot.lane.b32.xlu0 %v1976, 7
        %v2046 = vpop.permute.xlu0 %2045
        %2047 = vrot.lane.b32.xlu0 %v1977, 7
        %v2048 = vpop.permute.xlu0 %2047
        %2049 = vrot.lane.b32.xlu0 %v1978, 7
        %v2050 = vpop.permute.xlu0 %2049
        %2051 = vrot.lane.b32.xlu0 %v1979, 7
        %v2052 = vpop.permute.xlu0 %2051
        %2053 = vrot.lane.b32.xlu0 %v1980, 7
        %v2054 = vpop.permute.xlu0 %2053
        %2055 = vrot.lane.b32.xlu0 %v1981, 7
        %v2056 = vpop.permute.xlu0 %2055
        %2057 = vrot.lane.b32.xlu0 %v1982, 7
        %v2058 = vpop.permute.xlu0 %2057
        %2059 = vrot.lane.b32.xlu0 %v1983, 7
        %v2060 = vpop.permute.xlu0 %2059
        %2061 = vrot.lane.b32.xlu0 %v1984, 7
        %v2062 = vpop.permute.xlu0 %2061
        %2063 = vrot.lane.b32.xlu0 %v1985, 7
        %v2064 = vpop.permute.xlu0 %2063
        %2065 = vrot.lane.b32.xlu0 %v1986, 7
        %v2066 = vpop.permute.xlu0 %2065
        %2067 = vrot.lane.b32.xlu0 %v1987, 7
        %v2068 = vpop.permute.xlu0 %2067
        %2069 = vrot.lane.b32.xlu0 %v1988, 7
        %v2070 = vpop.permute.xlu0 %2069
        %2071 = vrot.lane.b32.xlu0 %v1989, 7
        %v2072 = vpop.permute.xlu0 %2071
        %2073 = vrot.lane.b32.xlu0 %v1990, 7
        %v2074 = vpop.permute.xlu0 %2073
        %2075 = vrot.lane.b32.xlu0 %v1991, 7
        %v2076 = vpop.permute.xlu0 %2075
        %2077 = vrot.lane.b32.xlu0 %v1992, 7
        %v2078 = vpop.permute.xlu0 %2077
        %2079 = vrot.lane.b32.xlu0 %v1993, 7
        %v2080 = vpop.permute.xlu0 %2079
        %2081 = vrot.lane.b32.xlu0 %v1994, 7
        %v2082 = vpop.permute.xlu0 %2081
        %2083 = vrot.lane.b32.xlu0 %v1995, 7
        %v2084 = vpop.permute.xlu0 %2083
        %2085 = vrot.lane.b32.xlu0 %v1996, 7
        %v2086 = vpop.permute.xlu0 %2085
        %2087 = vrot.lane.b32.xlu0 %v1997, 7
        %v2088 = vpop.permute.xlu0 %2087
        %2089 = vrot.lane.b32.xlu0 %v1998, 7
        %v2090 = vpop.permute.xlu0 %2089
        %2091 = vrot.lane.b32.xlu0 %v1999, 7
        %v2092 = vpop.permute.xlu0 %2091
        %2093 = vrot.lane.b32.xlu0 %v2000, 7
        %v2094 = vpop.permute.xlu0 %2093
        %2095 = vrot.lane.b32.xlu0 %v2001, 7
        %v2096 = vpop.permute.xlu0 %2095
        %2097 = vrot.lane.b32.xlu0 %v2002, 7
        %v2098 = vpop.permute.xlu0 %2097
        %2099 = vrot.lane.b32.xlu0 %v1971, 86
        %v2100 = vpop.permute.xlu0 %2099
        %2101 = vrot.lane.b32.xlu0 %v1972, 86
        %v2102 = vpop.permute.xlu0 %2101
        %2103 = vrot.lane.b32.xlu0 %v1973, 86
        %v2104 = vpop.permute.xlu0 %2103
        %2105 = vrot.lane.b32.xlu0 %v1974, 86
        %v2106 = vpop.permute.xlu0 %2105
        %2107 = vrot.lane.b32.xlu0 %v1975, 86
        %v2108 = vpop.permute.xlu0 %2107
        %2109 = vrot.lane.b32.xlu0 %v1976, 86
        %v2110 = vpop.permute.xlu0 %2109
        %2111 = vrot.lane.b32.xlu0 %v1977, 86
        %v2112 = vpop.permute.xlu0 %2111
        %2113 = vrot.lane.b32.xlu0 %v1978, 86
        %v2114 = vpop.permute.xlu0 %2113
        %2115 = vrot.lane.b32.xlu0 %v1979, 86
        %v2116 = vpop.permute.xlu0 %2115
        %2117 = vrot.lane.b32.xlu0 %v1980, 86
        %v2118 = vpop.permute.xlu0 %2117
        %2119 = vrot.lane.b32.xlu0 %v1981, 86
        %v2120 = vpop.permute.xlu0 %2119
        %2121 = vrot.lane.b32.xlu0 %v1982, 86
        %v2122 = vpop.permute.xlu0 %2121
        %2123 = vrot.lane.b32.xlu0 %v1983, 86
        %v2124 = vpop.permute.xlu0 %2123
        %2125 = vrot.lane.b32.xlu0 %v1984, 86
        %v2126 = vpop.permute.xlu0 %2125
        %2127 = vrot.lane.b32.xlu0 %v1985, 86
        %v2128 = vpop.permute.xlu0 %2127
        %2129 = vrot.lane.b32.xlu0 %v1986, 86
        %v2130 = vpop.permute.xlu0 %2129
        %2131 = vrot.lane.b32.xlu0 %v1987, 86
        %v2132 = vpop.permute.xlu0 %2131
        %2133 = vrot.lane.b32.xlu0 %v1988, 86
        %v2134 = vpop.permute.xlu0 %2133
        %2135 = vrot.lane.b32.xlu0 %v1989, 86
        %v2136 = vpop.permute.xlu0 %2135
        %2137 = vrot.lane.b32.xlu0 %v1990, 86
        %v2138 = vpop.permute.xlu0 %2137
        %2139 = vrot.lane.b32.xlu0 %v1991, 86
        %v2140 = vpop.permute.xlu0 %2139
        %2141 = vrot.lane.b32.xlu0 %v1992, 86
        %v2142 = vpop.permute.xlu0 %2141
        %2143 = vrot.lane.b32.xlu0 %v1993, 86
        %v2144 = vpop.permute.xlu0 %2143
        %2145 = vrot.lane.b32.xlu0 %v1994, 86
        %v2146 = vpop.permute.xlu0 %2145
        %2147 = vrot.lane.b32.xlu0 %v1995, 86
        %v2148 = vpop.permute.xlu0 %2147
        %2149 = vrot.lane.b32.xlu0 %v1996, 86
        %v2150 = vpop.permute.xlu0 %2149
        %2151 = vrot.lane.b32.xlu0 %v1997, 86
        %v2152 = vpop.permute.xlu0 %2151
        %2153 = vrot.lane.b32.xlu0 %v1998, 86
        %v2154 = vpop.permute.xlu0 %2153
        %2155 = vrot.lane.b32.xlu0 %v1999, 86
        %v2156 = vpop.permute.xlu0 %2155
        %2157 = vrot.lane.b32.xlu0 %v2000, 86
        %v2158 = vpop.permute.xlu0 %2157
        %2159 = vrot.lane.b32.xlu0 %v2001, 86
        %v2160 = vpop.permute.xlu0 %2159
        %2161 = vrot.lane.b32.xlu0 %v2002, 86
        %v2162 = vpop.permute.xlu0 %2161
        %vm2163 = vcmp.ge.s32.totalorder %v645, 7
        %v2164 = vsel %vm2163, %v2036, %v2100
        %v2165 = vsel %vm2163, %v2038, %v2102
        %v2166 = vsel %vm2163, %v2040, %v2104
        %v2167 = vsel %vm2163, %v2042, %v2106
        %v2168 = vsel %vm2163, %v2044, %v2108
        %v2169 = vsel %vm2163, %v2046, %v2110
        %v2170 = vsel %vm2163, %v2048, %v2112
        %v2171 = vsel %vm2163, %v2050, %v2114
        %v2172 = vsel %vm2163, %v2052, %v2116
        %v2173 = vsel %vm2163, %v2054, %v2118
        %v2174 = vsel %vm2163, %v2056, %v2120
        %v2175 = vsel %vm2163, %v2058, %v2122
        %v2176 = vsel %vm2163, %v2060, %v2124
        %v2177 = vsel %vm2163, %v2062, %v2126
        %v2178 = vsel %vm2163, %v2064, %v2128
        %v2179 = vsel %vm2163, %v2066, %v2130
        %v2180 = vsel %vm2163, %v2068, %v2132
        %v2181 = vsel %vm2163, %v2070, %v2134
        %v2182 = vsel %vm2163, %v2072, %v2136
        %v2183 = vsel %vm2163, %v2074, %v2138
        %v2184 = vsel %vm2163, %v2076, %v2140
        %v2185 = vsel %vm2163, %v2078, %v2142
        %v2186 = vsel %vm2163, %v2080, %v2144
        %v2187 = vsel %vm2163, %v2082, %v2146
        %v2188 = vsel %vm2163, %v2084, %v2148
        %v2189 = vsel %vm2163, %v2086, %v2150
        %v2190 = vsel %vm2163, %v2088, %v2152
        %v2191 = vsel %vm2163, %v2090, %v2154
        %v2192 = vsel %vm2163, %v2092, %v2156
        %v2193 = vsel %vm2163, %v2094, %v2158
        %v2194 = vsel %vm2163, %v2096, %v2160
        %v2195 = vsel %vm2163, %v2098, %v2162
        %2197 = vset.pattern.permute.xlu0 0
        %2198 = vperm.xlu0 %2197, %v2003
        %v2199 = vpop.permute.xlu0 %2198
        %2202 = vset.pattern.permute.xlu0 0
        %2203 = vperm.xlu0 %2202, %v2004
        %v2204 = vpop.permute.xlu0 %2203
        %2207 = vset.pattern.permute.xlu0 0
        %2208 = vperm.xlu0 %2207, %v2005
        %v2209 = vpop.permute.xlu0 %2208
        %2212 = vset.pattern.permute.xlu0 0
        %2213 = vperm.xlu0 %2212, %v2006
        %v2214 = vpop.permute.xlu0 %2213
        %2217 = vset.pattern.permute.xlu0 0
        %2218 = vperm.xlu0 %2217, %v2007
        %v2219 = vpop.permute.xlu0 %2218
        %2222 = vset.pattern.permute.xlu0 0
        %2223 = vperm.xlu0 %2222, %v2008
        %v2224 = vpop.permute.xlu0 %2223
        %2227 = vset.pattern.permute.xlu0 0
        %2228 = vperm.xlu0 %2227, %v2009
        %v2229 = vpop.permute.xlu0 %2228
        %2232 = vset.pattern.permute.xlu0 0
        %2233 = vperm.xlu0 %2232, %v2010
        %v2234 = vpop.permute.xlu0 %2233
        %2237 = vset.pattern.permute.xlu0 0
        %2238 = vperm.xlu0 %2237, %v2011
        %v2239 = vpop.permute.xlu0 %2238
        %2242 = vset.pattern.permute.xlu0 0
        %2243 = vperm.xlu0 %2242, %v2012
        %v2244 = vpop.permute.xlu0 %2243
        %2247 = vset.pattern.permute.xlu0 0
        %2248 = vperm.xlu0 %2247, %v2013
        %v2249 = vpop.permute.xlu0 %2248
        %2252 = vset.pattern.permute.xlu0 0
        %2253 = vperm.xlu0 %2252, %v2014
        %v2254 = vpop.permute.xlu0 %2253
        %2257 = vset.pattern.permute.xlu0 0
        %2258 = vperm.xlu0 %2257, %v2015
        %v2259 = vpop.permute.xlu0 %2258
        %2262 = vset.pattern.permute.xlu0 0
        %2263 = vperm.xlu0 %2262, %v2016
        %v2264 = vpop.permute.xlu0 %2263
        %2267 = vset.pattern.permute.xlu0 0
        %2268 = vperm.xlu0 %2267, %v2017
        %v2269 = vpop.permute.xlu0 %2268
        %2272 = vset.pattern.permute.xlu0 0
        %2273 = vperm.xlu0 %2272, %v2018
        %v2274 = vpop.permute.xlu0 %2273
        %2277 = vset.pattern.permute.xlu0 0
        %2278 = vperm.xlu0 %2277, %v2019
        %v2279 = vpop.permute.xlu0 %2278
        %2282 = vset.pattern.permute.xlu0 0
        %2283 = vperm.xlu0 %2282, %v2020
        %v2284 = vpop.permute.xlu0 %2283
        %2287 = vset.pattern.permute.xlu0 0
        %2288 = vperm.xlu0 %2287, %v2021
        %v2289 = vpop.permute.xlu0 %2288
        %2292 = vset.pattern.permute.xlu0 0
        %2293 = vperm.xlu0 %2292, %v2022
        %v2294 = vpop.permute.xlu0 %2293
        %2297 = vset.pattern.permute.xlu0 0
        %2298 = vperm.xlu0 %2297, %v2023
        %v2299 = vpop.permute.xlu0 %2298
        %2302 = vset.pattern.permute.xlu0 0
        %2303 = vperm.xlu0 %2302, %v2024
        %v2304 = vpop.permute.xlu0 %2303
        %2307 = vset.pattern.permute.xlu0 0
        %2308 = vperm.xlu0 %2307, %v2025
        %v2309 = vpop.permute.xlu0 %2308
        %2312 = vset.pattern.permute.xlu0 0
        %2313 = vperm.xlu0 %2312, %v2026
        %v2314 = vpop.permute.xlu0 %2313
        %2317 = vset.pattern.permute.xlu0 0
        %2318 = vperm.xlu0 %2317, %v2027
        %v2319 = vpop.permute.xlu0 %2318
        %2322 = vset.pattern.permute.xlu0 0
        %2323 = vperm.xlu0 %2322, %v2028
        %v2324 = vpop.permute.xlu0 %2323
        %2327 = vset.pattern.permute.xlu0 0
        %2328 = vperm.xlu0 %2327, %v2029
        %v2329 = vpop.permute.xlu0 %2328
        %2332 = vset.pattern.permute.xlu0 0
        %2333 = vperm.xlu0 %2332, %v2030
        %v2334 = vpop.permute.xlu0 %2333
        %2337 = vset.pattern.permute.xlu0 0
        %2338 = vperm.xlu0 %2337, %v2031
        %v2339 = vpop.permute.xlu0 %2338
        %2342 = vset.pattern.permute.xlu0 0
        %2343 = vperm.xlu0 %2342, %v2032
        %v2344 = vpop.permute.xlu0 %2343
        %2347 = vset.pattern.permute.xlu0 0
        %2348 = vperm.xlu0 %2347, %v2033
        %v2349 = vpop.permute.xlu0 %2348
        %2352 = vset.pattern.permute.xlu0 0
        %2353 = vperm.xlu0 %2352, %v2034
        %v2354 = vpop.permute.xlu0 %2353
        %v2356 = vmul.f32 %v2199, %v2164
        %v2357 = vmul.f32 %v2204, %v2165
        %v2358 = vmul.f32 %v2209, %v2166
        %v2359 = vmul.f32 %v2214, %v2167
        %v2360 = vmul.f32 %v2219, %v2168
        %v2361 = vmul.f32 %v2224, %v2169
        %v2362 = vmul.f32 %v2229, %v2170
        %v2363 = vmul.f32 %v2234, %v2171
        %v2364 = vmul.f32 %v2239, %v2172
        %v2365 = vmul.f32 %v2244, %v2173
        %v2366 = vmul.f32 %v2249, %v2174
        %v2367 = vmul.f32 %v2254, %v2175
        %v2368 = vmul.f32 %v2259, %v2176
        %v2369 = vmul.f32 %v2264, %v2177
        %v2370 = vmul.f32 %v2269, %v2178
        %v2371 = vmul.f32 %v2274, %v2179
        %v2372 = vmul.f32 %v2279, %v2180
        %v2373 = vmul.f32 %v2284, %v2181
        %v2374 = vmul.f32 %v2289, %v2182
        %v2375 = vmul.f32 %v2294, %v2183
        %v2376 = vmul.f32 %v2299, %v2184
        %v2377 = vmul.f32 %v2304, %v2185
        %v2378 = vmul.f32 %v2309, %v2186
        %v2379 = vmul.f32 %v2314, %v2187
        %v2380 = vmul.f32 %v2319, %v2188
        %v2381 = vmul.f32 %v2324, %v2189
        %v2382 = vmul.f32 %v2329, %v2190
        %v2383 = vmul.f32 %v2334, %v2191
        %v2384 = vmul.f32 %v2339, %v2192
        %v2385 = vmul.f32 %v2344, %v2193
        %v2386 = vmul.f32 %v2349, %v2194
        %v2387 = vmul.f32 %v2354, %v2195
        %2388 = vrot.lane.b32.xlu0 %v1971, 14
        %v2389 = vpop.permute.xlu0 %2388
        %2390 = vrot.lane.b32.xlu0 %v1972, 14
        %v2391 = vpop.permute.xlu0 %2390
        %2392 = vrot.lane.b32.xlu0 %v1973, 14
        %v2393 = vpop.permute.xlu0 %2392
        %2394 = vrot.lane.b32.xlu0 %v1974, 14
        %v2395 = vpop.permute.xlu0 %2394
        %2396 = vrot.lane.b32.xlu0 %v1975, 14
        %v2397 = vpop.permute.xlu0 %2396
        %2398 = vrot.lane.b32.xlu0 %v1976, 14
        %v2399 = vpop.permute.xlu0 %2398
        %2400 = vrot.lane.b32.xlu0 %v1977, 14
        %v2401 = vpop.permute.xlu0 %2400
        %2402 = vrot.lane.b32.xlu0 %v1978, 14
        %v2403 = vpop.permute.xlu0 %2402
        %2404 = vrot.lane.b32.xlu0 %v1979, 14
        %v2405 = vpop.permute.xlu0 %2404
        %2406 = vrot.lane.b32.xlu0 %v1980, 14
        %v2407 = vpop.permute.xlu0 %2406
        %2408 = vrot.lane.b32.xlu0 %v1981, 14
        %v2409 = vpop.permute.xlu0 %2408
        %2410 = vrot.lane.b32.xlu0 %v1982, 14
        %v2411 = vpop.permute.xlu0 %2410
        %2412 = vrot.lane.b32.xlu0 %v1983, 14
        %v2413 = vpop.permute.xlu0 %2412
        %2414 = vrot.lane.b32.xlu0 %v1984, 14
        %v2415 = vpop.permute.xlu0 %2414
        %2416 = vrot.lane.b32.xlu0 %v1985, 14
        %v2417 = vpop.permute.xlu0 %2416
        %2418 = vrot.lane.b32.xlu0 %v1986, 14
        %v2419 = vpop.permute.xlu0 %2418
        %2420 = vrot.lane.b32.xlu0 %v1987, 14
        %v2421 = vpop.permute.xlu0 %2420
        %2422 = vrot.lane.b32.xlu0 %v1988, 14
        %v2423 = vpop.permute.xlu0 %2422
        %2424 = vrot.lane.b32.xlu0 %v1989, 14
        %v2425 = vpop.permute.xlu0 %2424
        %2426 = vrot.lane.b32.xlu0 %v1990, 14
        %v2427 = vpop.permute.xlu0 %2426
        %2428 = vrot.lane.b32.xlu0 %v1991, 14
        %v2429 = vpop.permute.xlu0 %2428
        %2430 = vrot.lane.b32.xlu0 %v1992, 14
        %v2431 = vpop.permute.xlu0 %2430
        %2432 = vrot.lane.b32.xlu0 %v1993, 14
        %v2433 = vpop.permute.xlu0 %2432
        %2434 = vrot.lane.b32.xlu0 %v1994, 14
        %v2435 = vpop.permute.xlu0 %2434
        %2436 = vrot.lane.b32.xlu0 %v1995, 14
        %v2437 = vpop.permute.xlu0 %2436
        %2438 = vrot.lane.b32.xlu0 %v1996, 14
        %v2439 = vpop.permute.xlu0 %2438
        %2440 = vrot.lane.b32.xlu0 %v1997, 14
        %v2441 = vpop.permute.xlu0 %2440
        %2442 = vrot.lane.b32.xlu0 %v1998, 14
        %v2443 = vpop.permute.xlu0 %2442
        %2444 = vrot.lane.b32.xlu0 %v1999, 14
        %v2445 = vpop.permute.xlu0 %2444
        %2446 = vrot.lane.b32.xlu0 %v2000, 14
        %v2447 = vpop.permute.xlu0 %2446
        %2448 = vrot.lane.b32.xlu0 %v2001, 14
        %v2449 = vpop.permute.xlu0 %2448
        %2450 = vrot.lane.b32.xlu0 %v2002, 14
        %v2451 = vpop.permute.xlu0 %2450
        %2452 = vrot.lane.b32.xlu0 %v1971, 93
        %v2453 = vpop.permute.xlu0 %2452
        %2454 = vrot.lane.b32.xlu0 %v1972, 93
        %v2455 = vpop.permute.xlu0 %2454
        %2456 = vrot.lane.b32.xlu0 %v1973, 93
        %v2457 = vpop.permute.xlu0 %2456
        %2458 = vrot.lane.b32.xlu0 %v1974, 93
        %v2459 = vpop.permute.xlu0 %2458
        %2460 = vrot.lane.b32.xlu0 %v1975, 93
        %v2461 = vpop.permute.xlu0 %2460
        %2462 = vrot.lane.b32.xlu0 %v1976, 93
        %v2463 = vpop.permute.xlu0 %2462
        %2464 = vrot.lane.b32.xlu0 %v1977, 93
        %v2465 = vpop.permute.xlu0 %2464
        %2466 = vrot.lane.b32.xlu0 %v1978, 93
        %v2467 = vpop.permute.xlu0 %2466
        %2468 = vrot.lane.b32.xlu0 %v1979, 93
        %v2469 = vpop.permute.xlu0 %2468
        %2470 = vrot.lane.b32.xlu0 %v1980, 93
        %v2471 = vpop.permute.xlu0 %2470
        %2472 = vrot.lane.b32.xlu0 %v1981, 93
        %v2473 = vpop.permute.xlu0 %2472
        %2474 = vrot.lane.b32.xlu0 %v1982, 93
        %v2475 = vpop.permute.xlu0 %2474
        %2476 = vrot.lane.b32.xlu0 %v1983, 93
        %v2477 = vpop.permute.xlu0 %2476
        %2478 = vrot.lane.b32.xlu0 %v1984, 93
        %v2479 = vpop.permute.xlu0 %2478
        %2480 = vrot.lane.b32.xlu0 %v1985, 93
        %v2481 = vpop.permute.xlu0 %2480
        %2482 = vrot.lane.b32.xlu0 %v1986, 93
        %v2483 = vpop.permute.xlu0 %2482
        %2484 = vrot.lane.b32.xlu0 %v1987, 93
        %v2485 = vpop.permute.xlu0 %2484
        %2486 = vrot.lane.b32.xlu0 %v1988, 93
        %v2487 = vpop.permute.xlu0 %2486
        %2488 = vrot.lane.b32.xlu0 %v1989, 93
        %v2489 = vpop.permute.xlu0 %2488
        %2490 = vrot.lane.b32.xlu0 %v1990, 93
        %v2491 = vpop.permute.xlu0 %2490
        %2492 = vrot.lane.b32.xlu0 %v1991, 93
        %v2493 = vpop.permute.xlu0 %2492
        %2494 = vrot.lane.b32.xlu0 %v1992, 93
        %v2495 = vpop.permute.xlu0 %2494
        %2496 = vrot.lane.b32.xlu0 %v1993, 93
        %v2497 = vpop.permute.xlu0 %2496
        %2498 = vrot.lane.b32.xlu0 %v1994, 93
        %v2499 = vpop.permute.xlu0 %2498
        %2500 = vrot.lane.b32.xlu0 %v1995, 93
        %v2501 = vpop.permute.xlu0 %2500
        %2502 = vrot.lane.b32.xlu0 %v1996, 93
        %v2503 = vpop.permute.xlu0 %2502
        %2504 = vrot.lane.b32.xlu0 %v1997, 93
        %v2505 = vpop.permute.xlu0 %2504
        %2506 = vrot.lane.b32.xlu0 %v1998, 93
        %v2507 = vpop.permute.xlu0 %2506
        %2508 = vrot.lane.b32.xlu0 %v1999, 93
        %v2509 = vpop.permute.xlu0 %2508
        %2510 = vrot.lane.b32.xlu0 %v2000, 93
        %v2511 = vpop.permute.xlu0 %2510
        %2512 = vrot.lane.b32.xlu0 %v2001, 93
        %v2513 = vpop.permute.xlu0 %2512
        %2514 = vrot.lane.b32.xlu0 %v2002, 93
        %v2515 = vpop.permute.xlu0 %2514
        %vm2516 = vcmp.ge.s32.totalorder %v645, 14
        %v2517 = vsel %vm2516, %v2389, %v2453
        %v2518 = vsel %vm2516, %v2391, %v2455
        %v2519 = vsel %vm2516, %v2393, %v2457
        %v2520 = vsel %vm2516, %v2395, %v2459
        %v2521 = vsel %vm2516, %v2397, %v2461
        %v2522 = vsel %vm2516, %v2399, %v2463
        %v2523 = vsel %vm2516, %v2401, %v2465
        %v2524 = vsel %vm2516, %v2403, %v2467
        %v2525 = vsel %vm2516, %v2405, %v2469
        %v2526 = vsel %vm2516, %v2407, %v2471
        %v2527 = vsel %vm2516, %v2409, %v2473
        %v2528 = vsel %vm2516, %v2411, %v2475
        %v2529 = vsel %vm2516, %v2413, %v2477
        %v2530 = vsel %vm2516, %v2415, %v2479
        %v2531 = vsel %vm2516, %v2417, %v2481
        %v2532 = vsel %vm2516, %v2419, %v2483
        %v2533 = vsel %vm2516, %v2421, %v2485
        %v2534 = vsel %vm2516, %v2423, %v2487
        %v2535 = vsel %vm2516, %v2425, %v2489
        %v2536 = vsel %vm2516, %v2427, %v2491
        %v2537 = vsel %vm2516, %v2429, %v2493
        %v2538 = vsel %vm2516, %v2431, %v2495
        %v2539 = vsel %vm2516, %v2433, %v2497
        %v2540 = vsel %vm2516, %v2435, %v2499
        %v2541 = vsel %vm2516, %v2437, %v2501
        %v2542 = vsel %vm2516, %v2439, %v2503
        %v2543 = vsel %vm2516, %v2441, %v2505
        %v2544 = vsel %vm2516, %v2443, %v2507
        %v2545 = vsel %vm2516, %v2445, %v2509
        %v2546 = vsel %vm2516, %v2447, %v2511
        %v2547 = vsel %vm2516, %v2449, %v2513
        %v2548 = vsel %vm2516, %v2451, %v2515
        %2549 = vset.pattern.permute.xlu0 1
        %2550 = vperm.xlu0 %2549, %v2003
        %v2551 = vpop.permute.xlu0 %2550
        %2553 = vset.pattern.permute.xlu0 1
        %2554 = vperm.xlu0 %2553, %v2004
        %v2555 = vpop.permute.xlu0 %2554
        %2557 = vset.pattern.permute.xlu0 1
        %2558 = vperm.xlu0 %2557, %v2005
        %v2559 = vpop.permute.xlu0 %2558
        %2561 = vset.pattern.permute.xlu0 1
        %2562 = vperm.xlu0 %2561, %v2006
        %v2563 = vpop.permute.xlu0 %2562
        %2565 = vset.pattern.permute.xlu0 1
        %2566 = vperm.xlu0 %2565, %v2007
        %v2567 = vpop.permute.xlu0 %2566
        %2569 = vset.pattern.permute.xlu0 1
        %2570 = vperm.xlu0 %2569, %v2008
        %v2571 = vpop.permute.xlu0 %2570
        %2573 = vset.pattern.permute.xlu0 1
        %2574 = vperm.xlu0 %2573, %v2009
        %v2575 = vpop.permute.xlu0 %2574
        %2577 = vset.pattern.permute.xlu0 1
        %2578 = vperm.xlu0 %2577, %v2010
        %v2579 = vpop.permute.xlu0 %2578
        %2581 = vset.pattern.permute.xlu0 1
        %2582 = vperm.xlu0 %2581, %v2011
        %v2583 = vpop.permute.xlu0 %2582
        %2585 = vset.pattern.permute.xlu0 1
        %2586 = vperm.xlu0 %2585, %v2012
        %v2587 = vpop.permute.xlu0 %2586
        %2589 = vset.pattern.permute.xlu0 1
        %2590 = vperm.xlu0 %2589, %v2013
        %v2591 = vpop.permute.xlu0 %2590
        %2593 = vset.pattern.permute.xlu0 1
        %2594 = vperm.xlu0 %2593, %v2014
        %v2595 = vpop.permute.xlu0 %2594
        %2597 = vset.pattern.permute.xlu0 1
        %2598 = vperm.xlu0 %2597, %v2015
        %v2599 = vpop.permute.xlu0 %2598
        %2601 = vset.pattern.permute.xlu0 1
        %2602 = vperm.xlu0 %2601, %v2016
        %v2603 = vpop.permute.xlu0 %2602
        %2605 = vset.pattern.permute.xlu0 1
        %2606 = vperm.xlu0 %2605, %v2017
        %v2607 = vpop.permute.xlu0 %2606
        %2609 = vset.pattern.permute.xlu0 1
        %2610 = vperm.xlu0 %2609, %v2018
        %v2611 = vpop.permute.xlu0 %2610
        %2613 = vset.pattern.permute.xlu0 1
        %2614 = vperm.xlu0 %2613, %v2019
        %v2615 = vpop.permute.xlu0 %2614
        %2617 = vset.pattern.permute.xlu0 1
        %2618 = vperm.xlu0 %2617, %v2020
        %v2619 = vpop.permute.xlu0 %2618
        %2621 = vset.pattern.permute.xlu0 1
        %2622 = vperm.xlu0 %2621, %v2021
        %v2623 = vpop.permute.xlu0 %2622
        %2625 = vset.pattern.permute.xlu0 1
        %2626 = vperm.xlu0 %2625, %v2022
        %v2627 = vpop.permute.xlu0 %2626
        %2629 = vset.pattern.permute.xlu0 1
        %2630 = vperm.xlu0 %2629, %v2023
        %v2631 = vpop.permute.xlu0 %2630
        %2633 = vset.pattern.permute.xlu0 1
        %2634 = vperm.xlu0 %2633, %v2024
        %v2635 = vpop.permute.xlu0 %2634
        %2637 = vset.pattern.permute.xlu0 1
        %2638 = vperm.xlu0 %2637, %v2025
        %v2639 = vpop.permute.xlu0 %2638
        %2641 = vset.pattern.permute.xlu0 1
        %2642 = vperm.xlu0 %2641, %v2026
        %v2643 = vpop.permute.xlu0 %2642
        %2645 = vset.pattern.permute.xlu0 1
        %2646 = vperm.xlu0 %2645, %v2027
        %v2647 = vpop.permute.xlu0 %2646
        %2649 = vset.pattern.permute.xlu0 1
        %2650 = vperm.xlu0 %2649, %v2028
        %v2651 = vpop.permute.xlu0 %2650
        %2653 = vset.pattern.permute.xlu0 1
        %2654 = vperm.xlu0 %2653, %v2029
        %v2655 = vpop.permute.xlu0 %2654
        %2657 = vset.pattern.permute.xlu0 1
        %2658 = vperm.xlu0 %2657, %v2030
        %v2659 = vpop.permute.xlu0 %2658
        %2661 = vset.pattern.permute.xlu0 1
        %2662 = vperm.xlu0 %2661, %v2031
        %v2663 = vpop.permute.xlu0 %2662
        %2665 = vset.pattern.permute.xlu0 1
        %2666 = vperm.xlu0 %2665, %v2032
        %v2667 = vpop.permute.xlu0 %2666
        %2669 = vset.pattern.permute.xlu0 1
        %2670 = vperm.xlu0 %2669, %v2033
        %v2671 = vpop.permute.xlu0 %2670
        %2673 = vset.pattern.permute.xlu0 1
        %2674 = vperm.xlu0 %2673, %v2034
        %v2675 = vpop.permute.xlu0 %2674
        %v2677 = vmul.f32 %v2551, %v2517
        %v2678 = vmul.f32 %v2555, %v2518
        %v2679 = vmul.f32 %v2559, %v2519
        %v2680 = vmul.f32 %v2563, %v2520
        %v2681 = vmul.f32 %v2567, %v2521
        %v2682 = vmul.f32 %v2571, %v2522
        %v2683 = vmul.f32 %v2575, %v2523
        %v2684 = vmul.f32 %v2579, %v2524
        %v2685 = vmul.f32 %v2583, %v2525
        %v2686 = vmul.f32 %v2587, %v2526
        %v2687 = vmul.f32 %v2591, %v2527
        %v2688 = vmul.f32 %v2595, %v2528
        %v2689 = vmul.f32 %v2599, %v2529
        %v2690 = vmul.f32 %v2603, %v2530
        %v2691 = vmul.f32 %v2607, %v2531
        %v2692 = vmul.f32 %v2611, %v2532
        %v2693 = vmul.f32 %v2615, %v2533
        %v2694 = vmul.f32 %v2619, %v2534
        %v2695 = vmul.f32 %v2623, %v2535
        %v2696 = vmul.f32 %v2627, %v2536
        %v2697 = vmul.f32 %v2631, %v2537
        %v2698 = vmul.f32 %v2635, %v2538
        %v2699 = vmul.f32 %v2639, %v2539
        %v2700 = vmul.f32 %v2643, %v2540
        %v2701 = vmul.f32 %v2647, %v2541
        %v2702 = vmul.f32 %v2651, %v2542
        %v2703 = vmul.f32 %v2655, %v2543
        %v2704 = vmul.f32 %v2659, %v2544
        %v2705 = vmul.f32 %v2663, %v2545
        %v2706 = vmul.f32 %v2667, %v2546
        %v2707 = vmul.f32 %v2671, %v2547
        %v2708 = vmul.f32 %v2675, %v2548
        %v2709 = vadd.f32 %v2356, %v2677
        %v2710 = vadd.f32 %v2357, %v2678
        %v2711 = vadd.f32 %v2358, %v2679
        %v2712 = vadd.f32 %v2359, %v2680
        %v2713 = vadd.f32 %v2360, %v2681
        %v2714 = vadd.f32 %v2361, %v2682
        %v2715 = vadd.f32 %v2362, %v2683
        %v2716 = vadd.f32 %v2363, %v2684
        %v2717 = vadd.f32 %v2364, %v2685
        %v2718 = vadd.f32 %v2365, %v2686
        %v2719 = vadd.f32 %v2366, %v2687
        %v2720 = vadd.f32 %v2367, %v2688
        %v2721 = vadd.f32 %v2368, %v2689
        %v2722 = vadd.f32 %v2369, %v2690
        %v2723 = vadd.f32 %v2370, %v2691
        %v2724 = vadd.f32 %v2371, %v2692
        %v2725 = vadd.f32 %v2372, %v2693
        %v2726 = vadd.f32 %v2373, %v2694
        %v2727 = vadd.f32 %v2374, %v2695
        %v2728 = vadd.f32 %v2375, %v2696
        %v2729 = vadd.f32 %v2376, %v2697
        %v2730 = vadd.f32 %v2377, %v2698
        %v2731 = vadd.f32 %v2378, %v2699
        %v2732 = vadd.f32 %v2379, %v2700
        %v2733 = vadd.f32 %v2380, %v2701
        %v2734 = vadd.f32 %v2381, %v2702
        %v2735 = vadd.f32 %v2382, %v2703
        %v2736 = vadd.f32 %v2383, %v2704
        %v2737 = vadd.f32 %v2384, %v2705
        %v2738 = vadd.f32 %v2385, %v2706
        %v2739 = vadd.f32 %v2386, %v2707
        %v2740 = vadd.f32 %v2387, %v2708
        %2741 = vst [vmem:[%s609] sm:$0xff] %v2709
        %2742 = vst [vmem:[%s609 + $0x8] sm:$0xff] %v2710
        %2743 = vst [vmem:[%s609 + $0x10] sm:$0xff] %v2711
        %2744 = vst [vmem:[%s609 + $0x18] sm:$0xff] %v2712
        %2745 = vst [vmem:[%s609 + $0x20] sm:$0xff] %v2713
        %2746 = vst [vmem:[%s609 + $0x28] sm:$0xff] %v2714
        %2747 = vst [vmem:[%s609 + $0x30] sm:$0xff] %v2715
        %2748 = vst [vmem:[%s609 + $0x38] sm:$0xff] %v2716
        %2749 = vst [vmem:[%s609 + $0x40] sm:$0xff] %v2717
        %2750 = vst [vmem:[%s609 + $0x48] sm:$0xff] %v2718
        %2751 = vst [vmem:[%s609 + $0x50] sm:$0xff] %v2719
        %2752 = vst [vmem:[%s609 + $0x58] sm:$0xff] %v2720
        %2753 = vst [vmem:[%s609 + $0x60] sm:$0xff] %v2721
        %2754 = vst [vmem:[%s609 + $0x68] sm:$0xff] %v2722
        %2755 = vst [vmem:[%s609 + $0x70] sm:$0xff] %v2723
        %2756 = vst [vmem:[%s609 + $0x78] sm:$0xff] %v2724
        %2757 = vst [vmem:[%s609 + $0x80] sm:$0xff] %v2725
        %2758 = vst [vmem:[%s609 + $0x88] sm:$0xff] %v2726
        %2759 = vst [vmem:[%s609 + $0x90] sm:$0xff] %v2727
        %2760 = vst [vmem:[%s609 + $0x98] sm:$0xff] %v2728
        %2761 = vst [vmem:[%s609 + $0xa0] sm:$0xff] %v2729
        %2762 = vst [vmem:[%s609 + $0xa8] sm:$0xff] %v2730
        %2763 = vst [vmem:[%s609 + $0xb0] sm:$0xff] %v2731
        %2764 = vst [vmem:[%s609 + $0xb8] sm:$0xff] %v2732
        %2765 = vst [vmem:[%s609 + $0xc0] sm:$0xff] %v2733
        %2766 = vst [vmem:[%s609 + $0xc8] sm:$0xff] %v2734
        %2767 = vst [vmem:[%s609 + $0xd0] sm:$0xff] %v2735
        %2768 = vst [vmem:[%s609 + $0xd8] sm:$0xff] %v2736
        %2769 = vst [vmem:[%s609 + $0xe0] sm:$0xff] %v2737
        %2770 = vst [vmem:[%s609 + $0xe8] sm:$0xff] %v2738
        %2771 = vst [vmem:[%s609 + $0xf0] sm:$0xff] %v2739
        %2772 = vst [vmem:[%s609 + $0xf8] sm:$0xff] %v2740
        %s2773 = smul.u32 32, %s14
        %p2774 = scmp.lt.s32.totalorder %s2773, 63
        %s2775 = scalar_select %p2774, %s2773, 63
        %s2776 = smul.addr %s2775, 8
        %s2777 = scalar_lea.vmem %s3, %s2776
        // Predicated region
        $region71: #{_forward_impl.1} parent=65 // pred_check
          %p2778 = pneg %p105
        $region72: #{_forward_impl.1} parent=65 // pred_check_branch
          %2780 = sbr.rel (%p2778) target = $region74
        $region73: #{_forward_impl.1} parent=65 // pred_region
          %s2781 = smul.u32 32, %s14
        $region74: #{_forward_impl.1} parent=65 // pred_fallthru
          _
      $region66: #{_forward_impl.1} parent=5 // pred_fallthru
        _
      %p2782 = scmp.le.s32.totalorder 2, %s9
      // Predicated region
      $region75: #{_forward_impl.1} parent=5 // pred_check
        %p2783 = pneg %p2782
      $region76: #{_forward_impl.1} parent=5 // pred_check_branch
        %2785 = sbr.rel (%p2783) target = $region78
      $region77: #{_forward_impl.1} parent=5 // pred_region
        %s2786 = ssub.s32 %s9, 2
        // Predicated region
        $region79: #{_forward_impl.1} parent=77 // pred_check
          %p2787 = pneg %p111
        $region80: #{_forward_impl.1} parent=77 // pred_check_branch
          %2789 = sbr.rel (%p2787) target = $region82
        $region81: #{_forward_impl.1} parent=77 // pred_region
          %s2790 = smul.u32 32, %s15
          %p2791 = scmp.lt.s32.totalorder %s2790, 63
          %s2792 = scalar_select %p2791, %s2790, 63
          %s2793 = smul.addr %s2792, 8
          %s2794 = scalar_lea.vmem %s3, %s2793
        $region82: #{_forward_impl.1} parent=77 // pred_fallthru
          _
      $region78: #{_forward_impl.1} parent=5 // pred_fallthru
        _
    $region6: #{_forward_impl.1} parent=1 // loop_footer
      %s13 = sadd.s32 1, %s9
    $region7: #{_forward_impl.1} parent=1 // loop_footer_branch
      %8 = sbr.rel target = $region3
    $region8: #{_forward_impl.1} parent=1 // loop_exit
      _

</llo_original>
